<compile_context>
chip_gen: v7x
topology: tpu7x:2x2x1
jax: 0.10.0
libtpu: 0.0.40
codegen_flags: <defaults>
</compile_context>

<pallas_src>
import functools

import jax
import jax.numpy as jnp
from jax import lax
from jax.experimental import pallas as pl
from jax.experimental.pallas import tpu as pltpu


def _cross_attention_kernel(q_in_ref, kv_in_ref, wq_ref, wkv_ref, o_ref, *,
                            heads, dim_head, scale):
    # q_in_ref : (bb, Nq, dim)            bb batch elements per grid step
    # kv_in_ref: (bb, Nk, dim)
    # wq_ref   : (inner_dim, dim)         nn.Linear layout, resident in VMEM
    # wkv_ref  : (2*inner_dim, dim)       fused to_kv slab, resident in VMEM
    # o_ref    : (bb, Nq, inner_dim)      'b n (h d)' layout
    bb, nq, dim = q_in_ref.shape
    _, nk, _ = kv_in_ref.shape
    inner = heads * dim_head
    dt = q_in_ref.dtype

    # Fold the batch block into the projection rows so the MXU LHS has bb*N rows.
    x_q = q_in_ref[...].reshape(bb * nq, dim)     # native dtype -> MXU
    x_kv = kv_in_ref[...].reshape(bb * nk, dim)

    # x @ W.T without any host-side transpose: contract axis 1 of both operands.
    dn_xt = (((1,), (1,)), ((), ()))
    q_all = lax.dot_general(x_q, wq_ref[...], dn_xt,
                            preferred_element_type=jnp.float32)    # (bb*Nq, inner)
    kv_all = lax.dot_general(x_kv, wkv_ref[...], dn_xt,
                             preferred_element_type=jnp.float32)   # (bb*Nk, 2*inner)

    # Fold the attention scale into Q, then cast Q/K/V back to the input dtype so
    # the scores / PV matmuls run with MXU-native operands (full rate for bf16).
    q_all = (q_all * scale).astype(dt)
    k_all = kv_all[:, :inner].astype(dt)
    v_all = kv_all[:, inner:].astype(dt)

    # Per (batch-element, head) attention; both extents are small and static,
    # so the Python loops fully unroll.
    for b in range(bb):
        q_b = q_all[b * nq:(b + 1) * nq]          # (Nq, inner)
        k_b = k_all[b * nk:(b + 1) * nk]          # (Nk, inner)
        v_b = v_all[b * nk:(b + 1) * nk]          # (Nk, inner)
        head_outs = []
        for h in range(heads):
            lo, hi = h * dim_head, (h + 1) * dim_head
            q_h, k_h, v_h = q_b[:, lo:hi], k_b[:, lo:hi], v_b[:, lo:hi]

            # Scores: contract dim_head directly (no explicit K transpose).
            dots = lax.dot_general(q_h, k_h, dn_xt,
                                   preferred_element_type=jnp.float32)  # (Nq, Nk)

            # Numerically-stable softmax over keys (Softmax(dim=-1)); exact recip.
            m = jnp.max(dots, axis=-1, keepdims=True)
            p = jnp.exp(dots - m)
            inv_l = pl.reciprocal(jnp.sum(p, axis=-1, keepdims=True), approx=False)
            attn = (p * inv_l).astype(dt)          # input dtype -> MXU-native PV

            # Dropout(p=0.0) is the identity.
            head_outs.append(jnp.dot(attn, v_h,
                                     preferred_element_type=jnp.float32))  # (Nq, dh)

        # One full-lane-width (Nq, inner_dim) store per batch element — no
        # sub-128-lane masked partial stores.
        o_ref[b] = jnp.concatenate(head_outs, axis=-1).astype(o_ref.dtype)


def _pick_batch_block(B, Nq, target_rows=256):
    """Largest divisor of B such that bb*Nq roughly fills the MXU rows."""
    bb = max(1, min(B, max(1, target_rows // max(Nq, 1))))
    while B % bb:
        bb -= 1
    return bb


def cross_attention(query, key_value, wq, wkv, *, heads, dim_head,
                    batch_block=None):
    """Pallas implementation of Cross_Attention.forward.

    query     : (B, Nq, dim)
    key_value : (B, Nk, dim)
    wq        : (inner_dim, dim)     -- nn.Linear(dim, inner_dim).weight (no bias)
    wkv       : (2*inner_dim, dim)   -- nn.Linear(dim, 2*inner_dim).weight
    returns   : (B, Nq, inner_dim)   -- 'b n (h d)' layout, same as PyTorch
    """
    B, Nq, dim = query.shape
    _, Nk, _ = key_value.shape
    inner_dim = heads * dim_head
    assert wq.shape == (inner_dim, dim)
    assert wkv.shape == (2 * inner_dim, dim)
    scale = dim_head ** (-0.5)

    bb = _pick_batch_block(B, Nq) if batch_block is None else batch_block
    assert B % bb == 0
    grid = (B // bb,)

    kernel = functools.partial(_cross_attention_kernel,
                               heads=heads, dim_head=dim_head, scale=scale)

    # VMEM budget: physical capacity minus headroom (never the full 64 MiB on
    # v7x; up to 96 MiB on 128 MiB v5e/v6e parts).
    try:
        vmem_cap = pltpu.get_tpu_info().vmem_capacity_bytes
        vmem_limit = min(int(vmem_cap * 3 // 4), 96 << 20)
    except Exception:
        vmem_limit = 48 << 20

    def call(weight_pipeline_mode):
        if weight_pipeline_mode is None:
            def wspec(shape):
                return pl.BlockSpec(shape, lambda g: (0, 0))
        else:
            def wspec(shape):
                return pl.BlockSpec(shape, lambda g: (0, 0),
                                    pipeline_mode=weight_pipeline_mode)
        return pl.pallas_call(
            kernel,
            out_shape=jax.ShapeDtypeStruct((B, Nq, inner_dim), query.dtype),
            grid_spec=pltpu.PrefetchScalarGridSpec(
                num_scalar_prefetch=0,
                grid=grid,
                in_specs=[
                    pl.BlockSpec((bb, Nq, dim), lambda g: (g, 0, 0)),    # query
                    pl.BlockSpec((bb, Nk, dim), lambda g: (g, 0, 0)),    # key_value
                    wspec((inner_dim, dim)),                             # to_q weight
                    wspec((2 * inner_dim, dim)),                         # to_kv weight
                ],
                out_specs=pl.BlockSpec((bb, Nq, inner_dim), lambda g: (g, 0, 0)),
            ),
            compiler_params=pltpu.CompilerParams(
                dimension_semantics=("parallel",),
                vmem_limit_bytes=vmem_limit),
        )(query, key_value, wq, wkv)

    try:
        # Weights are grid-invariant -> single buffer (halves resident weight VMEM).
        return call(pl.Buffered(1))
    except Exception:
        # pipeline_mode not supported for top-level pallas_call on this jax build;
        # fall back to the default double-buffered specs.
        return call(None)


def _reference(query, key_value, wq, wkv, *, heads, dim_head):
    """Plain-JAX reference mirroring the PyTorch module exactly."""
    B, Nq, dim = query.shape
    inner_dim = heads * dim_head
    scale = dim_head ** (-0.5)
    q = query @ wq.T                        # (B, Nq, inner)
    kv = key_value @ wkv.T                  # (B, Nk, 2*inner)
    k, v = kv[..., :inner_dim], kv[..., inner_dim:]

    def split_heads(t):
        b, n, _ = t.shape
        return t.reshape(b, n, heads, dim_head).transpose(0, 2, 1, 3)

    qh, kh, vh = split_heads(q), split_heads(k), split_heads(v)
    dots = jnp.einsum('bhqd,bhkd->bhqk', qh, kh) * scale
    attn = jax.nn.softmax(dots, axis=-1)
    out = jnp.einsum('bhqk,bhkd->bhqd', attn, vh)
    return out.transpose(0, 2, 1, 3).reshape(B, Nq, inner_dim)


if __name__ == "__main__":
    # Small shapes consistent with the module's forward.
    B, Nq, Nk = 2, 8, 16
    dim = 32
    heads, dim_head = 2, 16
    inner_dim = heads * dim_head

    key = jax.random.PRNGKey(0)
    k1, k2, k3, k4 = jax.random.split(key, 4)
    query = jax.random.normal(k1, (B, Nq, dim), dtype=jnp.float32)
    key_value = jax.random.normal(k2, (B, Nk, dim), dtype=jnp.float32)
    # Deterministic synthetic weights (nn.Linear layout: (out_features, in_features)).
    wq = jax.random.normal(k3, (inner_dim, dim), dtype=jnp.float32) * 0.05
    wkv = jax.random.normal(k4, (2 * inner_dim, dim), dtype=jnp.float32) * 0.05

    out = cross_attention(query, key_value, wq, wkv,
                          heads=heads, dim_head=dim_head)
    out = jax.block_until_ready(out)

    ref = _reference(query, key_value, wq, wkv, heads=heads, dim_head=dim_head)
    assert out.shape == (B, Nq, inner_dim)
    # Tolerance covers the XLA default-precision matmuls in the reference.
    assert jnp.allclose(out, ref, atol=5e-3, rtol=5e-3), "mismatch vs reference"

    print("KERNEL_OK")
</pallas_src>

<mosaic_0001>
module attributes {stable_mosaic.version = 11 : i64} {
  func.func @_cross_attention_kernel(%arg0: i32, %arg1: memref<2x8x32xf32, #tpu.memory_space<vmem>>, %arg2: memref<2x16x32xf32, #tpu.memory_space<vmem>>, %arg3: memref<32x32xf32, #tpu.memory_space<vmem>>, %arg4: memref<64x32xf32, #tpu.memory_space<vmem>>, %arg5: memref<2x8x32xf32, #tpu.memory_space<vmem>>) attributes {dimension_semantics = [#tpu.dimension_semantics<parallel>], iteration_bounds = array<i64: 1>, scalar_prefetch = 0 : i64, scratch_operands = 0 : i64, tpu.core_type = #tpu.core_type<tc>, window_params = [{transform_indices = @transform_0, window_bounds = array<i64: 2, 8, 32>}, {transform_indices = @transform_1, window_bounds = array<i64: 2, 16, 32>}, {pipeline_mode = #tpu.pipeline_mode<synchronous>, transform_indices = @transform_2, window_bounds = array<i64: 32, 32>}, {pipeline_mode = #tpu.pipeline_mode<synchronous>, transform_indices = @transform_3, window_bounds = array<i64: 64, 32>}, {transform_indices = @transform_4, window_bounds = array<i64: 2, 8, 32>}]} {
    %c0 = arith.constant 0 : index
    %c0_0 = arith.constant 0 : index
    %c0_1 = arith.constant 0 : index
    %0 = vector.load %arg1[%c0, %c0_0, %c0_1] : memref<2x8x32xf32, #tpu.memory_space<vmem>>, vector<2x8x32xf32>
    %1 = vector.shape_cast %0 : vector<2x8x32xf32> to vector<16x32xf32>
    %c0_2 = arith.constant 0 : index
    %c0_3 = arith.constant 0 : index
    %c0_4 = arith.constant 0 : index
    %2 = vector.load %arg2[%c0_2, %c0_3, %c0_4] : memref<2x16x32xf32, #tpu.memory_space<vmem>>, vector<2x16x32xf32>
    %3 = vector.shape_cast %2 : vector<2x16x32xf32> to vector<32x32xf32>
    %c0_5 = arith.constant 0 : index
    %c0_6 = arith.constant 0 : index
    %4 = vector.load %arg3[%c0_5, %c0_6] : memref<32x32xf32, #tpu.memory_space<vmem>>, vector<32x32xf32>
    %cst = arith.constant dense<0.000000e+00> : vector<16x32xf32>
    %5 = tpu.matmul %1, %4, %cst {dimension_numbers = #tpu.dot_dimension_numbers<[1], [1], [0], [0], [0, 0, 1, 0], [], []>} : vector<16x32xf32>, vector<32x32xf32>, vector<16x32xf32> -> vector<16x32xf32>
    %c0_7 = arith.constant 0 : index
    %c0_8 = arith.constant 0 : index
    %6 = vector.load %arg4[%c0_7, %c0_8] : memref<64x32xf32, #tpu.memory_space<vmem>>, vector<64x32xf32>
    %cst_9 = arith.constant dense<0.000000e+00> : vector<32x64xf32>
    %7 = tpu.matmul %3, %6, %cst_9 {dimension_numbers = #tpu.dot_dimension_numbers<[1], [1], [0], [0], [0, 0, 1, 0], [], []>} : vector<32x32xf32>, vector<64x32xf32>, vector<32x64xf32> -> vector<32x64xf32>
    %cst_10 = arith.constant 2.500000e-01 : f32
    %8 = vector.broadcast %cst_10 : f32 to vector<16x32xf32>
    %9 = arith.mulf %5, %8 : vector<16x32xf32>
    %10 = vector.extract_strided_slice %7 {offsets = [0, 0], sizes = [32, 32], strides = [1, 1]} : vector<32x64xf32> to vector<32x32xf32>
    %11 = vector.extract_strided_slice %7 {offsets = [0, 32], sizes = [32, 32], strides = [1, 1]} : vector<32x64xf32> to vector<32x32xf32>
    %12 = vector.extract_strided_slice %9 {offsets = [0, 0], sizes = [8, 32], strides = [1, 1]} : vector<16x32xf32> to vector<8x32xf32>
    %13 = vector.extract_strided_slice %10 {offsets = [0, 0], sizes = [16, 32], strides = [1, 1]} : vector<32x32xf32> to vector<16x32xf32>
    %14 = vector.extract_strided_slice %11 {offsets = [0, 0], sizes = [16, 32], strides = [1, 1]} : vector<32x32xf32> to vector<16x32xf32>
    %15 = vector.extract_strided_slice %12 {offsets = [0, 0], sizes = [8, 16], strides = [1, 1]} : vector<8x32xf32> to vector<8x16xf32>
    %16 = vector.extract_strided_slice %13 {offsets = [0, 0], sizes = [16, 16], strides = [1, 1]} : vector<16x32xf32> to vector<16x16xf32>
    %17 = vector.extract_strided_slice %14 {offsets = [0, 0], sizes = [16, 16], strides = [1, 1]} : vector<16x32xf32> to vector<16x16xf32>
    %cst_11 = arith.constant dense<0.000000e+00> : vector<8x16xf32>
    %18 = tpu.matmul %15, %16, %cst_11 {dimension_numbers = #tpu.dot_dimension_numbers<[1], [1], [0], [0], [0, 0, 1, 0], [], []>} : vector<8x16xf32>, vector<16x16xf32>, vector<8x16xf32> -> vector<8x16xf32>
    %cst_12 = arith.constant dense<0xFF800000> : vector<8xf32>
    %19 = vector.multi_reduction <maximumf>, %18, %cst_12 [1] : vector<8x16xf32> to vector<8xf32>
    %20 = vector.shape_cast %19 : vector<8xf32> to vector<8x1xf32>
    %21 = vector.broadcast %20 : vector<8x1xf32> to vector<8x16xf32>
    %22 = arith.subf %18, %21 : vector<8x16xf32>
    %23 = math.exp %22 : vector<8x16xf32>
    %cst_13 = arith.constant dense<0.000000e+00> : vector<8xf32>
    %24 = vector.multi_reduction <add>, %23, %cst_13 [1] : vector<8x16xf32> to vector<8xf32>
    %25 = vector.shape_cast %24 : vector<8xf32> to vector<8x1xf32>
    %26 = tpu.reciprocal %25 : vector<8x1xf32> -> vector<8x1xf32>
    %27 = vector.broadcast %26 : vector<8x1xf32> to vector<8x16xf32>
    %28 = arith.mulf %23, %27 : vector<8x16xf32>
    %cst_14 = arith.constant dense<0.000000e+00> : vector<8x16xf32>
    %29 = tpu.matmul %28, %17, %cst_14 {dimension_numbers = #tpu.dot_dimension_numbers<[1], [0], [0], [1], [0, 0, 1, 1], [], []>} : vector<8x16xf32>, vector<16x16xf32>, vector<8x16xf32> -> vector<8x16xf32>
    %30 = vector.extract_strided_slice %12 {offsets = [0, 16], sizes = [8, 16], strides = [1, 1]} : vector<8x32xf32> to vector<8x16xf32>
    %31 = vector.extract_strided_slice %13 {offsets = [0, 16], sizes = [16, 16], strides = [1, 1]} : vector<16x32xf32> to vector<16x16xf32>
    %32 = vector.extract_strided_slice %14 {offsets = [0, 16], sizes = [16, 16], strides = [1, 1]} : vector<16x32xf32> to vector<16x16xf32>
    %cst_15 = arith.constant dense<0.000000e+00> : vector<8x16xf32>
    %33 = tpu.matmul %30, %31, %cst_15 {dimension_numbers = #tpu.dot_dimension_numbers<[1], [1], [0], [0], [0, 0, 1, 0], [], []>} : vector<8x16xf32>, vector<16x16xf32>, vector<8x16xf32> -> vector<8x16xf32>
    %cst_16 = arith.constant dense<0xFF800000> : vector<8xf32>
    %34 = vector.multi_reduction <maximumf>, %33, %cst_16 [1] : vector<8x16xf32> to vector<8xf32>
    %35 = vector.shape_cast %34 : vector<8xf32> to vector<8x1xf32>
    %36 = vector.broadcast %35 : vector<8x1xf32> to vector<8x16xf32>
    %37 = arith.subf %33, %36 : vector<8x16xf32>
    %38 = math.exp %37 : vector<8x16xf32>
    %cst_17 = arith.constant dense<0.000000e+00> : vector<8xf32>
    %39 = vector.multi_reduction <add>, %38, %cst_17 [1] : vector<8x16xf32> to vector<8xf32>
    %40 = vector.shape_cast %39 : vector<8xf32> to vector<8x1xf32>
    %41 = tpu.reciprocal %40 : vector<8x1xf32> -> vector<8x1xf32>
    %42 = vector.broadcast %41 : vector<8x1xf32> to vector<8x16xf32>
    %43 = arith.mulf %38, %42 : vector<8x16xf32>
    %cst_18 = arith.constant dense<0.000000e+00> : vector<8x16xf32>
    %44 = tpu.matmul %43, %32, %cst_18 {dimension_numbers = #tpu.dot_dimension_numbers<[1], [0], [0], [1], [0, 0, 1, 1], [], []>} : vector<8x16xf32>, vector<16x16xf32>, vector<8x16xf32> -> vector<8x16xf32>
    %45 = tpu.concatenate %29, %44 in 1 : vector<8x16xf32>, vector<8x16xf32> -> vector<8x32xf32>
    %c0_19 = arith.constant 0 : index
    %c0_20 = arith.constant 0 : index
    %c0_21 = arith.constant 0 : index
    %46 = vector.load %arg5[%c0_19, %c0_20, %c0_21] : memref<2x8x32xf32, #tpu.memory_space<vmem>>, vector<1x8x32xf32>
    %47 = vector.shape_cast %46 : vector<1x8x32xf32> to vector<8x32xf32>
    %48 = vector.shape_cast %45 : vector<8x32xf32> to vector<1x8x32xf32>
    tpu.vector_store %arg5[%c0_19, %c0_20, %c0_21], %48 {strides = array<i32>} : memref<2x8x32xf32, #tpu.memory_space<vmem>>, vector<1x8x32xf32>,
    %49 = vector.extract_strided_slice %9 {offsets = [8, 0], sizes = [8, 32], strides = [1, 1]} : vector<16x32xf32> to vector<8x32xf32>
    %50 = vector.extract_strided_slice %10 {offsets = [16, 0], sizes = [16, 32], strides = [1, 1]} : vector<32x32xf32> to vector<16x32xf32>
    %51 = vector.extract_strided_slice %11 {offsets = [16, 0], sizes = [16, 32], strides = [1, 1]} : vector<32x32xf32> to vector<16x32xf32>
    %52 = vector.extract_strided_slice %49 {offsets = [0, 0], sizes = [8, 16], strides = [1, 1]} : vector<8x32xf32> to vector<8x16xf32>
    %53 = vector.extract_strided_slice %50 {offsets = [0, 0], sizes = [16, 16], strides = [1, 1]} : vector<16x32xf32> to vector<16x16xf32>
    %54 = vector.extract_strided_slice %51 {offsets = [0, 0], sizes = [16, 16], strides = [1, 1]} : vector<16x32xf32> to vector<16x16xf32>
    %cst_22 = arith.constant dense<0.000000e+00> : vector<8x16xf32>
    %55 = tpu.matmul %52, %53, %cst_22 {dimension_numbers = #tpu.dot_dimension_numbers<[1], [1], [0], [0], [0, 0, 1, 0], [], []>} : vector<8x16xf32>, vector<16x16xf32>, vector<8x16xf32> -> vector<8x16xf32>
    %cst_23 = arith.constant dense<0xFF800000> : vector<8xf32>
    %56 = vector.multi_reduction <maximumf>, %55, %cst_23 [1] : vector<8x16xf32> to vector<8xf32>
    %57 = vector.shape_cast %56 : vector<8xf32> to vector<8x1xf32>
    %58 = vector.broadcast %57 : vector<8x1xf32> to vector<8x16xf32>
    %59 = arith.subf %55, %58 : vector<8x16xf32>
    %60 = math.exp %59 : vector<8x16xf32>
    %cst_24 = arith.constant dense<0.000000e+00> : vector<8xf32>
    %61 = vector.multi_reduction <add>, %60, %cst_24 [1] : vector<8x16xf32> to vector<8xf32>
    %62 = vector.shape_cast %61 : vector<8xf32> to vector<8x1xf32>
    %63 = tpu.reciprocal %62 : vector<8x1xf32> -> vector<8x1xf32>
    %64 = vector.broadcast %63 : vector<8x1xf32> to vector<8x16xf32>
    %65 = arith.mulf %60, %64 : vector<8x16xf32>
    %cst_25 = arith.constant dense<0.000000e+00> : vector<8x16xf32>
    %66 = tpu.matmul %65, %54, %cst_25 {dimension_numbers = #tpu.dot_dimension_numbers<[1], [0], [0], [1], [0, 0, 1, 1], [], []>} : vector<8x16xf32>, vector<16x16xf32>, vector<8x16xf32> -> vector<8x16xf32>
    %67 = vector.extract_strided_slice %49 {offsets = [0, 16], sizes = [8, 16], strides = [1, 1]} : vector<8x32xf32> to vector<8x16xf32>
    %68 = vector.extract_strided_slice %50 {offsets = [0, 16], sizes = [16, 16], strides = [1, 1]} : vector<16x32xf32> to vector<16x16xf32>
    %69 = vector.extract_strided_slice %51 {offsets = [0, 16], sizes = [16, 16], strides = [1, 1]} : vector<16x32xf32> to vector<16x16xf32>
    %cst_26 = arith.constant dense<0.000000e+00> : vector<8x16xf32>
    %70 = tpu.matmul %67, %68, %cst_26 {dimension_numbers = #tpu.dot_dimension_numbers<[1], [1], [0], [0], [0, 0, 1, 0], [], []>} : vector<8x16xf32>, vector<16x16xf32>, vector<8x16xf32> -> vector<8x16xf32>
    %cst_27 = arith.constant dense<0xFF800000> : vector<8xf32>
    %71 = vector.multi_reduction <maximumf>, %70, %cst_27 [1] : vector<8x16xf32> to vector<8xf32>
    %72 = vector.shape_cast %71 : vector<8xf32> to vector<8x1xf32>
    %73 = vector.broadcast %72 : vector<8x1xf32> to vector<8x16xf32>
    %74 = arith.subf %70, %73 : vector<8x16xf32>
    %75 = math.exp %74 : vector<8x16xf32>
    %cst_28 = arith.constant dense<0.000000e+00> : vector<8xf32>
    %76 = vector.multi_reduction <add>, %75, %cst_28 [1] : vector<8x16xf32> to vector<8xf32>
    %77 = vector.shape_cast %76 : vector<8xf32> to vector<8x1xf32>
    %78 = tpu.reciprocal %77 : vector<8x1xf32> -> vector<8x1xf32>
    %79 = vector.broadcast %78 : vector<8x1xf32> to vector<8x16xf32>
    %80 = arith.mulf %75, %79 : vector<8x16xf32>
    %cst_29 = arith.constant dense<0.000000e+00> : vector<8x16xf32>
    %81 = tpu.matmul %80, %69, %cst_29 {dimension_numbers = #tpu.dot_dimension_numbers<[1], [0], [0], [1], [0, 0, 1, 1], [], []>} : vector<8x16xf32>, vector<16x16xf32>, vector<8x16xf32> -> vector<8x16xf32>
    %82 = tpu.concatenate %66, %81 in 1 : vector<8x16xf32>, vector<8x16xf32> -> vector<8x32xf32>
    %c1 = arith.constant 1 : index
    %c0_30 = arith.constant 0 : index
    %c0_31 = arith.constant 0 : index
    %83 = vector.load %arg5[%c1, %c0_30, %c0_31] : memref<2x8x32xf32, #tpu.memory_space<vmem>>, vector<1x8x32xf32>
    %84 = vector.shape_cast %83 : vector<1x8x32xf32> to vector<8x32xf32>
    %85 = vector.shape_cast %82 : vector<8x32xf32> to vector<1x8x32xf32>
    tpu.vector_store %arg5[%c1, %c0_30, %c0_31], %85 {strides = array<i32>} : memref<2x8x32xf32, #tpu.memory_space<vmem>>, vector<1x8x32xf32>,
    return
  }
  func.func @transform_0(%arg0: i32) -> (i32, i32, i32) {
    %c0_i32 = arith.constant 0 : i32
    %c0_i32_0 = arith.constant 0 : i32
    %c0_i32_1 = arith.constant 0 : i32
    return %arg0, %c0_i32, %c0_i32_0 : i32, i32, i32
  }
  func.func @transform_1(%arg0: i32) -> (i32, i32, i32) {
    %c0_i32 = arith.constant 0 : i32
    %c0_i32_0 = arith.constant 0 : i32
    %c0_i32_1 = arith.constant 0 : i32
    return %arg0, %c0_i32, %c0_i32_0 : i32, i32, i32
  }
  func.func @transform_2(%arg0: i32) -> (i32, i32) {
    %c0_i32 = arith.constant 0 : i32
    %c0_i32_0 = arith.constant 0 : i32
    %c0_i32_1 = arith.constant 0 : i32
    return %c0_i32, %c0_i32_0 : i32, i32
  }
  func.func @transform_3(%arg0: i32) -> (i32, i32) {
    %c0_i32 = arith.constant 0 : i32
    %c0_i32_0 = arith.constant 0 : i32
    %c0_i32_1 = arith.constant 0 : i32
    return %c0_i32, %c0_i32_0 : i32, i32
  }
  func.func @transform_4(%arg0: i32) -> (i32, i32, i32) {
    %c0_i32 = arith.constant 0 : i32
    %c0_i32_0 = arith.constant 0 : i32
    %c0_i32_1 = arith.constant 0 : i32
    return %arg0, %c0_i32, %c0_i32_0 : i32, i32, i32
  }
}

module attributes {stable_mosaic.version = 11 : i64} {
  func.func @_cross_attention_kernel(%arg0: i32, %arg1: memref<2x8x32xf32, #tpu.memory_space<vmem>>, %arg2: memref<2x16x32xf32, #tpu.memory_space<vmem>>, %arg3: memref<32x32xf32, #tpu.memory_space<vmem>>, %arg4: memref<64x32xf32, #tpu.memory_space<vmem>>, %arg5: memref<2x8x32xf32, #tpu.memory_space<vmem>>) attributes {dimension_semantics = [#tpu.dimension_semantics<parallel>], iteration_bounds = array<i64: 1>, scalar_prefetch = 0 : i64, scratch_operands = 0 : i64, tpu.core_type = #tpu.core_type<tc>, window_params = [{transform_indices = @transform_0, window_bounds = array<i64: 2, 8, 32>}, {transform_indices = @transform_1, window_bounds = array<i64: 2, 16, 32>}, {pipeline_mode = #tpu.pipeline_mode<synchronous>, transform_indices = @transform_2, window_bounds = array<i64: 32, 32>}, {pipeline_mode = #tpu.pipeline_mode<synchronous>, transform_indices = @transform_3, window_bounds = array<i64: 64, 32>}, {transform_indices = @transform_4, window_bounds = array<i64: 2, 8, 32>}]} {
    %c0 = arith.constant 0 : index
    %c0_0 = arith.constant 0 : index
    %c0_1 = arith.constant 0 : index
    %0 = vector.load %arg1[%c0, %c0_0, %c0_1] : memref<2x8x32xf32, #tpu.memory_space<vmem>>, vector<2x8x32xf32>
    %1 = vector.shape_cast %0 : vector<2x8x32xf32> to vector<16x32xf32>
    %c0_2 = arith.constant 0 : index
    %c0_3 = arith.constant 0 : index
    %c0_4 = arith.constant 0 : index
    %2 = vector.load %arg2[%c0_2, %c0_3, %c0_4] : memref<2x16x32xf32, #tpu.memory_space<vmem>>, vector<2x16x32xf32>
    %3 = vector.shape_cast %2 : vector<2x16x32xf32> to vector<32x32xf32>
    %c0_5 = arith.constant 0 : index
    %c0_6 = arith.constant 0 : index
    %4 = vector.load %arg3[%c0_5, %c0_6] : memref<32x32xf32, #tpu.memory_space<vmem>>, vector<32x32xf32>
    %cst = arith.constant dense<0.000000e+00> : vector<16x32xf32>
    %5 = tpu.matmul %1, %4, %cst {dimension_numbers = #tpu.dot_dimension_numbers<[1], [1], [0], [0], [0, 0, 1, 0], [], []>} : vector<16x32xf32>, vector<32x32xf32>, vector<16x32xf32> -> vector<16x32xf32>
    %c0_7 = arith.constant 0 : index
    %c0_8 = arith.constant 0 : index
    %6 = vector.load %arg4[%c0_7, %c0_8] : memref<64x32xf32, #tpu.memory_space<vmem>>, vector<64x32xf32>
    %cst_9 = arith.constant dense<0.000000e+00> : vector<32x64xf32>
    %7 = tpu.matmul %3, %6, %cst_9 {dimension_numbers = #tpu.dot_dimension_numbers<[1], [1], [0], [0], [0, 0, 1, 0], [], []>} : vector<32x32xf32>, vector<64x32xf32>, vector<32x64xf32> -> vector<32x64xf32>
    %cst_10 = arith.constant 2.500000e-01 : f32
    %8 = vector.broadcast %cst_10 : f32 to vector<16x32xf32>
    %9 = arith.mulf %5, %8 : vector<16x32xf32>
    %10 = vector.extract_strided_slice %7 {offsets = [0, 0], sizes = [32, 32], strides = [1, 1]} : vector<32x64xf32> to vector<32x32xf32>
    %11 = vector.extract_strided_slice %7 {offsets = [0, 32], sizes = [32, 32], strides = [1, 1]} : vector<32x64xf32> to vector<32x32xf32>
    %12 = vector.extract_strided_slice %9 {offsets = [0, 0], sizes = [8, 32], strides = [1, 1]} : vector<16x32xf32> to vector<8x32xf32>
    %13 = vector.extract_strided_slice %10 {offsets = [0, 0], sizes = [16, 32], strides = [1, 1]} : vector<32x32xf32> to vector<16x32xf32>
    %14 = vector.extract_strided_slice %11 {offsets = [0, 0], sizes = [16, 32], strides = [1, 1]} : vector<32x32xf32> to vector<16x32xf32>
    %15 = vector.extract_strided_slice %12 {offsets = [0, 0], sizes = [8, 16], strides = [1, 1]} : vector<8x32xf32> to vector<8x16xf32>
    %16 = vector.extract_strided_slice %13 {offsets = [0, 0], sizes = [16, 16], strides = [1, 1]} : vector<16x32xf32> to vector<16x16xf32>
    %17 = vector.extract_strided_slice %14 {offsets = [0, 0], sizes = [16, 16], strides = [1, 1]} : vector<16x32xf32> to vector<16x16xf32>
    %cst_11 = arith.constant dense<0.000000e+00> : vector<8x16xf32>
    %18 = tpu.matmul %15, %16, %cst_11 {dimension_numbers = #tpu.dot_dimension_numbers<[1], [1], [0], [0], [0, 0, 1, 0], [], []>} : vector<8x16xf32>, vector<16x16xf32>, vector<8x16xf32> -> vector<8x16xf32>
    %cst_12 = arith.constant dense<0xFF800000> : vector<8xf32>
    %19 = vector.multi_reduction <maximumf>, %18, %cst_12 [1] : vector<8x16xf32> to vector<8xf32>
    %20 = vector.shape_cast %19 : vector<8xf32> to vector<8x1xf32>
    %21 = vector.broadcast %20 : vector<8x1xf32> to vector<8x16xf32>
    %22 = arith.subf %18, %21 : vector<8x16xf32>
    %23 = math.exp %22 : vector<8x16xf32>
    %cst_13 = arith.constant dense<0.000000e+00> : vector<8xf32>
    %24 = vector.multi_reduction <add>, %23, %cst_13 [1] : vector<8x16xf32> to vector<8xf32>
    %25 = vector.shape_cast %24 : vector<8xf32> to vector<8x1xf32>
    %26 = tpu.reciprocal %25 : vector<8x1xf32> -> vector<8x1xf32>
    %27 = vector.broadcast %26 : vector<8x1xf32> to vector<8x16xf32>
    %28 = arith.mulf %23, %27 : vector<8x16xf32>
    %cst_14 = arith.constant dense<0.000000e+00> : vector<8x16xf32>
    %29 = tpu.matmul %28, %17, %cst_14 {dimension_numbers = #tpu.dot_dimension_numbers<[1], [0], [0], [1], [0, 0, 1, 1], [], []>} : vector<8x16xf32>, vector<16x16xf32>, vector<8x16xf32> -> vector<8x16xf32>
    %30 = vector.extract_strided_slice %12 {offsets = [0, 16], sizes = [8, 16], strides = [1, 1]} : vector<8x32xf32> to vector<8x16xf32>
    %31 = vector.extract_strided_slice %13 {offsets = [0, 16], sizes = [16, 16], strides = [1, 1]} : vector<16x32xf32> to vector<16x16xf32>
    %32 = vector.extract_strided_slice %14 {offsets = [0, 16], sizes = [16, 16], strides = [1, 1]} : vector<16x32xf32> to vector<16x16xf32>
    %cst_15 = arith.constant dense<0.000000e+00> : vector<8x16xf32>
    %33 = tpu.matmul %30, %31, %cst_15 {dimension_numbers = #tpu.dot_dimension_numbers<[1], [1], [0], [0], [0, 0, 1, 0], [], []>} : vector<8x16xf32>, vector<16x16xf32>, vector<8x16xf32> -> vector<8x16xf32>
    %cst_16 = arith.constant dense<0xFF800000> : vector<8xf32>
    %34 = vector.multi_reduction <maximumf>, %33, %cst_16 [1] : vector<8x16xf32> to vector<8xf32>
    %35 = vector.shape_cast %34 : vector<8xf32> to vector<8x1xf32>
    %36 = vector.broadcast %35 : vector<8x1xf32> to vector<8x16xf32>
    %37 = arith.subf %33, %36 : vector<8x16xf32>
    %38 = math.exp %37 : vector<8x16xf32>
    %cst_17 = arith.constant dense<0.000000e+00> : vector<8xf32>
    %39 = vector.multi_reduction <add>, %38, %cst_17 [1] : vector<8x16xf32> to vector<8xf32>
    %40 = vector.shape_cast %39 : vector<8xf32> to vector<8x1xf32>
    %41 = tpu.reciprocal %40 : vector<8x1xf32> -> vector<8x1xf32>
    %42 = vector.broadcast %41 : vector<8x1xf32> to vector<8x16xf32>
    %43 = arith.mulf %38, %42 : vector<8x16xf32>
    %cst_18 = arith.constant dense<0.000000e+00> : vector<8x16xf32>
    %44 = tpu.matmul %43, %32, %cst_18 {dimension_numbers = #tpu.dot_dimension_numbers<[1], [0], [0], [1], [0, 0, 1, 1], [], []>} : vector<8x16xf32>, vector<16x16xf32>, vector<8x16xf32> -> vector<8x16xf32>
    %45 = tpu.concatenate %29, %44 in 1 : vector<8x16xf32>, vector<8x16xf32> -> vector<8x32xf32>
    %c0_19 = arith.constant 0 : index
    %c0_20 = arith.constant 0 : index
    %c0_21 = arith.constant 0 : index
    %46 = vector.load %arg5[%c0_19, %c0_20, %c0_21] : memref<2x8x32xf32, #tpu.memory_space<vmem>>, vector<1x8x32xf32>
    %47 = vector.shape_cast %46 : vector<1x8x32xf32> to vector<8x32xf32>
    %48 = vector.shape_cast %45 : vector<8x32xf32> to vector<1x8x32xf32>
    tpu.vector_store %arg5[%c0_19, %c0_20, %c0_21], %48 {strides = array<i32>} : memref<2x8x32xf32, #tpu.memory_space<vmem>>, vector<1x8x32xf32>,
    %49 = vector.extract_strided_slice %9 {offsets = [8, 0], sizes = [8, 32], strides = [1, 1]} : vector<16x32xf32> to vector<8x32xf32>
    %50 = vector.extract_strided_slice %10 {offsets = [16, 0], sizes = [16, 32], strides = [1, 1]} : vector<32x32xf32> to vector<16x32xf32>
    %51 = vector.extract_strided_slice %11 {offsets = [16, 0], sizes = [16, 32], strides = [1, 1]} : vector<32x32xf32> to vector<16x32xf32>
    %52 = vector.extract_strided_slice %49 {offsets = [0, 0], sizes = [8, 16], strides = [1, 1]} : vector<8x32xf32> to vector<8x16xf32>
    %53 = vector.extract_strided_slice %50 {offsets = [0, 0], sizes = [16, 16], strides = [1, 1]} : vector<16x32xf32> to vector<16x16xf32>
    %54 = vector.extract_strided_slice %51 {offsets = [0, 0], sizes = [16, 16], strides = [1, 1]} : vector<16x32xf32> to vector<16x16xf32>
    %cst_22 = arith.constant dense<0.000000e+00> : vector<8x16xf32>
    %55 = tpu.matmul %52, %53, %cst_22 {dimension_numbers = #tpu.dot_dimension_numbers<[1], [1], [0], [0], [0, 0, 1, 0], [], []>} : vector<8x16xf32>, vector<16x16xf32>, vector<8x16xf32> -> vector<8x16xf32>
    %cst_23 = arith.constant dense<0xFF800000> : vector<8xf32>
    %56 = vector.multi_reduction <maximumf>, %55, %cst_23 [1] : vector<8x16xf32> to vector<8xf32>
    %57 = vector.shape_cast %56 : vector<8xf32> to vector<8x1xf32>
    %58 = vector.broadcast %57 : vector<8x1xf32> to vector<8x16xf32>
    %59 = arith.subf %55, %58 : vector<8x16xf32>
    %60 = math.exp %59 : vector<8x16xf32>
    %cst_24 = arith.constant dense<0.000000e+00> : vector<8xf32>
    %61 = vector.multi_reduction <add>, %60, %cst_24 [1] : vector<8x16xf32> to vector<8xf32>
    %62 = vector.shape_cast %61 : vector<8xf32> to vector<8x1xf32>
    %63 = tpu.reciprocal %62 : vector<8x1xf32> -> vector<8x1xf32>
    %64 = vector.broadcast %63 : vector<8x1xf32> to vector<8x16xf32>
    %65 = arith.mulf %60, %64 : vector<8x16xf32>
    %cst_25 = arith.constant dense<0.000000e+00> : vector<8x16xf32>
    %66 = tpu.matmul %65, %54, %cst_25 {dimension_numbers = #tpu.dot_dimension_numbers<[1], [0], [0], [1], [0, 0, 1, 1], [], []>} : vector<8x16xf32>, vector<16x16xf32>, vector<8x16xf32> -> vector<8x16xf32>
    %67 = vector.extract_strided_slice %49 {offsets = [0, 16], sizes = [8, 16], strides = [1, 1]} : vector<8x32xf32> to vector<8x16xf32>
    %68 = vector.extract_strided_slice %50 {offsets = [0, 16], sizes = [16, 16], strides = [1, 1]} : vector<16x32xf32> to vector<16x16xf32>
    %69 = vector.extract_strided_slice %51 {offsets = [0, 16], sizes = [16, 16], strides = [1, 1]} : vector<16x32xf32> to vector<16x16xf32>
    %cst_26 = arith.constant dense<0.000000e+00> : vector<8x16xf32>
    %70 = tpu.matmul %67, %68, %cst_26 {dimension_numbers = #tpu.dot_dimension_numbers<[1], [1], [0], [0], [0, 0, 1, 0], [], []>} : vector<8x16xf32>, vector<16x16xf32>, vector<8x16xf32> -> vector<8x16xf32>
    %cst_27 = arith.constant dense<0xFF800000> : vector<8xf32>
    %71 = vector.multi_reduction <maximumf>, %70, %cst_27 [1] : vector<8x16xf32> to vector<8xf32>
    %72 = vector.shape_cast %71 : vector<8xf32> to vector<8x1xf32>
    %73 = vector.broadcast %72 : vector<8x1xf32> to vector<8x16xf32>
    %74 = arith.subf %70, %73 : vector<8x16xf32>
    %75 = math.exp %74 : vector<8x16xf32>
    %cst_28 = arith.constant dense<0.000000e+00> : vector<8xf32>
    %76 = vector.multi_reduction <add>, %75, %cst_28 [1] : vector<8x16xf32> to vector<8xf32>
    %77 = vector.shape_cast %76 : vector<8xf32> to vector<8x1xf32>
    %78 = tpu.reciprocal %77 : vector<8x1xf32> -> vector<8x1xf32>
    %79 = vector.broadcast %78 : vector<8x1xf32> to vector<8x16xf32>
    %80 = arith.mulf %75, %79 : vector<8x16xf32>
    %cst_29 = arith.constant dense<0.000000e+00> : vector<8x16xf32>
    %81 = tpu.matmul %80, %69, %cst_29 {dimension_numbers = #tpu.dot_dimension_numbers<[1], [0], [0], [1], [0, 0, 1, 1], [], []>} : vector<8x16xf32>, vector<16x16xf32>, vector<8x16xf32> -> vector<8x16xf32>
    %82 = tpu.concatenate %66, %81 in 1 : vector<8x16xf32>, vector<8x16xf32> -> vector<8x32xf32>
    %c1 = arith.constant 1 : index
    %c0_30 = arith.constant 0 : index
    %c0_31 = arith.constant 0 : index
    %83 = vector.load %arg5[%c1, %c0_30, %c0_31] : memref<2x8x32xf32, #tpu.memory_space<vmem>>, vector<1x8x32xf32>
    %84 = vector.shape_cast %83 : vector<1x8x32xf32> to vector<8x32xf32>
    %85 = vector.shape_cast %82 : vector<8x32xf32> to vector<1x8x32xf32>
    tpu.vector_store %arg5[%c1, %c0_30, %c0_31], %85 {strides = array<i32>} : memref<2x8x32xf32, #tpu.memory_space<vmem>>, vector<1x8x32xf32>,
    return
  }
  func.func @transform_0(%arg0: i32) -> (i32, i32, i32) {
    %c0_i32 = arith.constant 0 : i32
    %c0_i32_0 = arith.constant 0 : i32
    %c0_i32_1 = arith.constant 0 : i32
    return %arg0, %c0_i32, %c0_i32_0 : i32, i32, i32
  }
  func.func @transform_1(%arg0: i32) -> (i32, i32, i32) {
    %c0_i32 = arith.constant 0 : i32
    %c0_i32_0 = arith.constant 0 : i32
    %c0_i32_1 = arith.constant 0 : i32
    return %arg0, %c0_i32, %c0_i32_0 : i32, i32, i32
  }
  func.func @transform_2(%arg0: i32) -> (i32, i32) {
    %c0_i32 = arith.constant 0 : i32
    %c0_i32_0 = arith.constant 0 : i32
    %c0_i32_1 = arith.constant 0 : i32
    return %c0_i32, %c0_i32_0 : i32, i32
  }
  func.func @transform_3(%arg0: i32) -> (i32, i32) {
    %c0_i32 = arith.constant 0 : i32
    %c0_i32_0 = arith.constant 0 : i32
    %c0_i32_1 = arith.constant 0 : i32
    return %c0_i32, %c0_i32_0 : i32, i32
  }
  func.func @transform_4(%arg0: i32) -> (i32, i32, i32) {
    %c0_i32 = arith.constant 0 : i32
    %c0_i32_0 = arith.constant 0 : i32
    %c0_i32_1 = arith.constant 0 : i32
    return %arg0, %c0_i32, %c0_i32_0 : i32, i32, i32
  }
}

</mosaic_0001>

<llo_original>
// kernel: tpu_custom_call.1
$region0: #{tpu_custom_call.1}
  #allocation0 [shape = 'u32[]', space=smem, size = 0x4, offset = 0x4, fixed_abs, tag = 'smem constant byte address 0x4 - core index']
  #allocation1 [shape = 'u32[144,128]{1,0:T(1,128)}', space=vmem, size = 0x12000, scoped, tag = 'internal scratch']
  %s0 = inlined_call_operand.vmem [shape: f32[2,8,32], index: 0, kind: input, shape index: {}]
  %s1 = inlined_call_operand.vmem [shape: f32[2,16,32], index: 1, kind: input, shape index: {}]
  %s2 = inlined_call_operand.vmem [shape: f32[32,32], index: 2, kind: input, shape index: {}]
  %s3 = inlined_call_operand.vmem [shape: f32[64,32], index: 3, kind: input, shape index: {}]
  %s4 = inlined_call_operand.hbm [shape: f32[2,8,32], index: 4, kind: output, shape index: {}]
  %s5 = sld [smem:[#allocation0]]
  $region26: #{tpu_custom_call.1} parent=0
    _
  %s7 = ssub.s32 1, %s5
  %s8 = scalar_select 0, %s7, %s5
  $region1: #{tpu_custom_call.1} parent=0
    #allocation2 [shape = 'u8[8192]{0}', space=vmem, size = 0x2000, scoped, tag = 'output window, operand 0, single buffered']
    #allocation3 [shape = 's32[1]{0}', space=sflag, size = 0x4, scoped, tag = 'scoped memory for tpu_custom_call.1']
    %9 = vsyncpa [#allocation3], 0
    // Predicated region
    $region2: #{tpu_custom_call.1} parent=1 // pred_check
      _
    $region3: #{tpu_custom_call.1} parent=1 // pred_check_branch
      %11 = sbr.rel (0) target = $region5
    $region4: #{tpu_custom_call.1} parent=1 // pred_region
      _
    $region5: #{tpu_custom_call.1} parent=1 // pred_fallthru
      _
    // Predicated region
    $region6: #{tpu_custom_call.1} parent=1 // pred_check
      _
    $region7: #{tpu_custom_call.1} parent=1 // pred_check_branch
      %13 = sbr.rel (0) target = $region9
    $region8: #{tpu_custom_call.1} parent=1 // pred_region
      _
    $region9: #{tpu_custom_call.1} parent=1 // pred_fallthru
      _
    // Predicated region
    $region10: #{tpu_custom_call.1} parent=1 // pred_check
      _
    $region11: #{tpu_custom_call.1} parent=1 // pred_check_branch
      %15 = sbr.rel (0) target = $region13
    $region12: #{tpu_custom_call.1} parent=1 // pred_region
      _
    $region13: #{tpu_custom_call.1} parent=1 // pred_fallthru
      _
    // Predicated region
    $region14: #{tpu_custom_call.1} parent=1 // pred_check
      _
    $region15: #{tpu_custom_call.1} parent=1 // pred_check_branch
      %17 = sbr.rel (0) target = $region17
    $region16: #{tpu_custom_call.1} parent=1 // pred_region
      _
    $region17: #{tpu_custom_call.1} parent=1 // pred_fallthru
      _
    %v18 = vld [vmem:[%s0] sm:$0xff]
    %v19 = vld [vmem:[%s0 + $0x8] sm:$0xff]
    %v20 = vld [vmem:[%s1] sm:$0xff]
    %v21 = vld [vmem:[%s1 + $0x8] sm:$0xff]
    %v22 = vld [vmem:[%s1 + $0x10] sm:$0xff]
    %v23 = vld [vmem:[%s1 + $0x18] sm:$0xff]
    %v24 = vld [vmem:[%s2] sm:$0xff]
    %v25 = vld [vmem:[%s2 + $0x8] sm:$0xff]
    %v26 = vld [vmem:[%s2 + $0x10] sm:$0xff]
    %v27 = vld [vmem:[%s2 + $0x18] sm:$0xff]
    %vm28 = vcmask 261120
    %v30 = vsel %vm28, %v18, 0
    %v33 = vsel %vm28, %v19, 0
    %v36 = vsel %vm28, %v24, 0
    %v39 = vsel %vm28, %v25, 0
    %v42 = vsel %vm28, %v26, 0
    %v45 = vsel %vm28, %v27, 0
    %47 = vmatprep.subr.mxu0 0.0
    %48 = vmatpush1.xpose.msra.mxu0 %v36
    %49 = vmatprep.subr.mxu0 0.0
    %50 = vmatpush1.xpose.msra.mxu0 %v39
    %51 = vmatprep.subr.mxu0 0.0
    %52 = vmatpush1.xpose.msra.mxu0 %v42
    %53 = vmatprep.subr.mxu0 0.0
    %54 = vmatpush1.xpose.msra.mxu0 %v45
    %55 = vmatprep.subr.mxu0 0.0
    %56 = vmatpush1.xpose.msra.mxu0 0.0
    %57 = vmatprep.subr.mxu0 0.0
    %58 = vmatpush1.xpose.msra.mxu0 0.0
    %59 = vmatprep.subr.mxu0 0.0
    %60 = vmatpush1.xpose.msra.mxu0 0.0
    %61 = vmatprep.subr.mxu0 0.0
    %62 = vmatpush1.xpose.msra.mxu0 0.0
    %63 = vmatprep.subr.mxu0 0.0
    %64 = vmatpush1.xpose.msra.mxu0 0.0
    %65 = vmatprep.subr.mxu0 0.0
    %66 = vmatpush1.xpose.msra.mxu0 0.0
    %67 = vmatprep.subr.mxu0 0.0
    %68 = vmatpush1.xpose.msra.mxu0 0.0
    %69 = vmatprep.subr.mxu0 0.0
    %70 = vmatpush1.xpose.msra.mxu0 0.0
    %71 = vmatprep.subr.mxu0 0.0
    %72 = vmatpush1.xpose.msra.mxu0 0.0
    %73 = vmatprep.subr.mxu0 0.0
    %74 = vmatpush1.xpose.msra.mxu0 0.0
    %75 = vmatprep.subr.mxu0 0.0
    %76 = vmatpush1.xpose.msra.mxu0 0.0
    %77 = vmatprep.subr.mxu0 0.0
    %78 = vmatpush1.xpose.msra.mxu0 0.0
    %79 = vmatprep.subr.mxu0 0.0
    %80 = vmatpush1.xpose.msra.mxu0 0.0
    %81 = vmatprep.subr.mxu0 0.0
    %82 = vmatpush1.xpose.msra.mxu0 0.0
    %83 = vmatprep.subr.mxu0 0.0
    %84 = vmatpush1.xpose.msra.mxu0 0.0
    %85 = vmatprep.subr.mxu0 0.0
    %86 = vmatpush1.xpose.msra.mxu0 0.0
    %87 = vmatprep.subr.mxu0 0.0
    %88 = vmatpush1.xpose.msra.mxu0 0.0
    %89 = vmatprep.subr.mxu0 0.0
    %90 = vmatpush1.xpose.msra.mxu0 0.0
    %91 = vmatprep.subr.mxu0 0.0
    %92 = vmatpush1.xpose.msra.mxu0 0.0
    %93 = vmatprep.subr.mxu0 0.0
    %94 = vmatpush1.xpose.msra.mxu0 0.0
    %95 = vmatprep.subr.mxu0 0.0
    %96 = vmatpush1.xpose.msra.mxu0 0.0
    %97 = vmatprep.subr.mxu0 0.0
    %98 = vmatpush1.xpose.msra.mxu0 0.0
    %99 = vmatprep.subr.mxu0 0.0
    %100 = vmatpush1.xpose.msra.mxu0 0.0
    %101 = vmatprep.subr.mxu0 0.0
    %102 = vmatpush1.xpose.msra.mxu0 0.0
    %103 = vmatprep.subr.mxu0 0.0
    %104 = vmatpush1.xpose.msra.mxu0 0.0
    %105 = vmatprep.subr.mxu0 0.0
    %106 = vmatpush1.xpose.msra.mxu0 0.0
    %107 = vmatprep.subr.mxu0 0.0
    %108 = vmatpush1.xpose.msra.mxu0 0.0
    %109 = vmatprep.subr.mxu0 0.0
    %110 = vmatpush1.xpose.msra.mxu0 0.0
    %111 = vmatprep.mubr.f32.mxu0 0.0
    %112 = vmatmul.mubr.f32.gmra.mrb[0].mxu0 %v30
    %v113 = vpop.f32.mrb[0].mxu0
    %v114 = vadd.f32 0.0, %v113
    %v115 = vpop.f32.mrb[0].mxu0
    %116 = vmatprep.mubr.f32.mxu0 0.0
    %117 = vmatmul.mubr.f32.gmra.mrb[0].mxu0 %v33
    %v118 = vpop.f32.mrb[0].mxu0
    %v119 = vadd.f32 0.0, %v118
    %v120 = vpop.f32.mrb[0].mxu0
    %121 = vdwg.mxu0
    %v122 = vld [vmem:[%s3] sm:$0xff]
    %v123 = vld [vmem:[%s3 + $0x8] sm:$0xff]
    %v124 = vld [vmem:[%s3 + $0x10] sm:$0xff]
    %v125 = vld [vmem:[%s3 + $0x18] sm:$0xff]
    %v126 = vld [vmem:[%s3 + $0x20] sm:$0xff]
    %v127 = vld [vmem:[%s3 + $0x28] sm:$0xff]
    %v128 = vld [vmem:[%s3 + $0x30] sm:$0xff]
    %v129 = vld [vmem:[%s3 + $0x38] sm:$0xff]
    %v131 = vsel %vm28, %v20, 0
    %v134 = vsel %vm28, %v21, 0
    %v137 = vsel %vm28, %v22, 0
    %v140 = vsel %vm28, %v23, 0
    %v143 = vsel %vm28, %v122, 0
    %v146 = vsel %vm28, %v123, 0
    %v149 = vsel %vm28, %v124, 0
    %v152 = vsel %vm28, %v125, 0
    %v155 = vsel %vm28, %v126, 0
    %v158 = vsel %vm28, %v127, 0
    %v161 = vsel %vm28, %v128, 0
    %v164 = vsel %vm28, %v129, 0
    %166 = vmatprep.subr.mxu0 0.0
    %167 = vmatpush1.xpose.msra.mxu0 %v143
    %168 = vmatprep.subr.mxu0 0.0
    %169 = vmatpush1.xpose.msra.mxu0 %v146
    %170 = vmatprep.subr.mxu0 0.0
    %171 = vmatpush1.xpose.msra.mxu0 %v149
    %172 = vmatprep.subr.mxu0 0.0
    %173 = vmatpush1.xpose.msra.mxu0 %v152
    %174 = vmatprep.subr.mxu0 0.0
    %175 = vmatpush1.xpose.msra.mxu0 %v155
    %176 = vmatprep.subr.mxu0 0.0
    %177 = vmatpush1.xpose.msra.mxu0 %v158
    %178 = vmatprep.subr.mxu0 0.0
    %179 = vmatpush1.xpose.msra.mxu0 %v161
    %180 = vmatprep.subr.mxu0 0.0
    %181 = vmatpush1.xpose.msra.mxu0 %v164
    %182 = vmatprep.subr.mxu0 0.0
    %183 = vmatpush1.xpose.msra.mxu0 0.0
    %184 = vmatprep.subr.mxu0 0.0
    %185 = vmatpush1.xpose.msra.mxu0 0.0
    %186 = vmatprep.subr.mxu0 0.0
    %187 = vmatpush1.xpose.msra.mxu0 0.0
    %188 = vmatprep.subr.mxu0 0.0
    %189 = vmatpush1.xpose.msra.mxu0 0.0
    %190 = vmatprep.subr.mxu0 0.0
    %191 = vmatpush1.xpose.msra.mxu0 0.0
    %192 = vmatprep.subr.mxu0 0.0
    %193 = vmatpush1.xpose.msra.mxu0 0.0
    %194 = vmatprep.subr.mxu0 0.0
    %195 = vmatpush1.xpose.msra.mxu0 0.0
    %196 = vmatprep.subr.mxu0 0.0
    %197 = vmatpush1.xpose.msra.mxu0 0.0
    %198 = vmatprep.subr.mxu0 0.0
    %199 = vmatpush1.xpose.msra.mxu0 0.0
    %200 = vmatprep.subr.mxu0 0.0
    %201 = vmatpush1.xpose.msra.mxu0 0.0
    %202 = vmatprep.subr.mxu0 0.0
    %203 = vmatpush1.xpose.msra.mxu0 0.0
    %204 = vmatprep.subr.mxu0 0.0
    %205 = vmatpush1.xpose.msra.mxu0 0.0
    %206 = vmatprep.subr.mxu0 0.0
    %207 = vmatpush1.xpose.msra.mxu0 0.0
    %208 = vmatprep.subr.mxu0 0.0
    %209 = vmatpush1.xpose.msra.mxu0 0.0
    %210 = vmatprep.subr.mxu0 0.0
    %211 = vmatpush1.xpose.msra.mxu0 0.0
    %212 = vmatprep.subr.mxu0 0.0
    %213 = vmatpush1.xpose.msra.mxu0 0.0
    %214 = vmatprep.subr.mxu0 0.0
    %215 = vmatpush1.xpose.msra.mxu0 0.0
    %216 = vmatprep.subr.mxu0 0.0
    %217 = vmatpush1.xpose.msra.mxu0 0.0
    %218 = vmatprep.subr.mxu0 0.0
    %219 = vmatpush1.xpose.msra.mxu0 0.0
    %220 = vmatprep.subr.mxu0 0.0
    %221 = vmatpush1.xpose.msra.mxu0 0.0
    %222 = vmatprep.subr.mxu0 0.0
    %223 = vmatpush1.xpose.msra.mxu0 0.0
    %224 = vmatprep.subr.mxu0 0.0
    %225 = vmatpush1.xpose.msra.mxu0 0.0
    %226 = vmatprep.subr.mxu0 0.0
    %227 = vmatpush1.xpose.msra.mxu0 0.0
    %228 = vmatprep.subr.mxu0 0.0
    %229 = vmatpush1.xpose.msra.mxu0 0.0
    %230 = vmatprep.mubr.f32.mxu0 0.0
    %231 = vmatmul.mubr.f32.gmra.mrb[0].mxu0 %v131
    %v232 = vpop.f32.mrb[0].mxu0
    %v233 = vadd.f32 0.0, %v232
    %v234 = vpop.f32.mrb[0].mxu0
    %235 = vmatprep.mubr.f32.mxu0 0.0
    %236 = vmatmul.mubr.f32.gmra.mrb[0].mxu0 %v134
    %v237 = vpop.f32.mrb[0].mxu0
    %v238 = vadd.f32 0.0, %v237
    %v239 = vpop.f32.mrb[0].mxu0
    %240 = vmatprep.mubr.f32.mxu0 0.0
    %241 = vmatmul.mubr.f32.gmra.mrb[0].mxu0 %v137
    %v242 = vpop.f32.mrb[0].mxu0
    %v243 = vadd.f32 0.0, %v242
    %v244 = vpop.f32.mrb[0].mxu0
    %245 = vmatprep.mubr.f32.mxu0 0.0
    %246 = vmatmul.mubr.f32.gmra.mrb[0].mxu0 %v140
    %v247 = vpop.f32.mrb[0].mxu0
    %v248 = vadd.f32 0.0, %v247
    %v249 = vpop.f32.mrb[0].mxu0
    %250 = vdwg.mxu0
    %v251 = vmul.f32 %v114, 0.25
    %v252 = vmul.f32 %v119, 0.25
    %vm253 = vcmask 130048
    %v255 = vsel %vm253, %v251, 0
    %v258 = vsel %vm253, %v233, 0
    %v261 = vsel %vm253, %v238, 0
    %263 = vmatprep.subr.mxu0 0.0
    %264 = vmatpush1.xpose.msra.mxu0 %v258
    %265 = vmatprep.subr.mxu0 0.0
    %266 = vmatpush1.xpose.msra.mxu0 %v261
    %267 = vmatprep.subr.mxu0 0.0
    %268 = vmatpush1.xpose.msra.mxu0 0.0
    %269 = vmatprep.subr.mxu0 0.0
    %270 = vmatpush1.xpose.msra.mxu0 0.0
    %271 = vmatprep.subr.mxu0 0.0
    %272 = vmatpush1.xpose.msra.mxu0 0.0
    %273 = vmatprep.subr.mxu0 0.0
    %274 = vmatpush1.xpose.msra.mxu0 0.0
    %275 = vmatprep.subr.mxu0 0.0
    %276 = vmatpush1.xpose.msra.mxu0 0.0
    %277 = vmatprep.subr.mxu0 0.0
    %278 = vmatpush1.xpose.msra.mxu0 0.0
    %279 = vmatprep.subr.mxu0 0.0
    %280 = vmatpush1.xpose.msra.mxu0 0.0
    %281 = vmatprep.subr.mxu0 0.0
    %282 = vmatpush1.xpose.msra.mxu0 0.0
    %283 = vmatprep.subr.mxu0 0.0
    %284 = vmatpush1.xpose.msra.mxu0 0.0
    %285 = vmatprep.subr.mxu0 0.0
    %286 = vmatpush1.xpose.msra.mxu0 0.0
    %287 = vmatprep.subr.mxu0 0.0
    %288 = vmatpush1.xpose.msra.mxu0 0.0
    %289 = vmatprep.subr.mxu0 0.0
    %290 = vmatpush1.xpose.msra.mxu0 0.0
    %291 = vmatprep.subr.mxu0 0.0
    %292 = vmatpush1.xpose.msra.mxu0 0.0
    %293 = vmatprep.subr.mxu0 0.0
    %294 = vmatpush1.xpose.msra.mxu0 0.0
    %295 = vmatprep.subr.mxu0 0.0
    %296 = vmatpush1.xpose.msra.mxu0 0.0
    %297 = vmatprep.subr.mxu0 0.0
    %298 = vmatpush1.xpose.msra.mxu0 0.0
    %299 = vmatprep.subr.mxu0 0.0
    %300 = vmatpush1.xpose.msra.mxu0 0.0
    %301 = vmatprep.subr.mxu0 0.0
    %302 = vmatpush1.xpose.msra.mxu0 0.0
    %303 = vmatprep.subr.mxu0 0.0
    %304 = vmatpush1.xpose.msra.mxu0 0.0
    %305 = vmatprep.subr.mxu0 0.0
    %306 = vmatpush1.xpose.msra.mxu0 0.0
    %307 = vmatprep.subr.mxu0 0.0
    %308 = vmatpush1.xpose.msra.mxu0 0.0
    %309 = vmatprep.subr.mxu0 0.0
    %310 = vmatpush1.xpose.msra.mxu0 0.0
    %311 = vmatprep.subr.mxu0 0.0
    %312 = vmatpush1.xpose.msra.mxu0 0.0
    %313 = vmatprep.subr.mxu0 0.0
    %314 = vmatpush1.xpose.msra.mxu0 0.0
    %315 = vmatprep.subr.mxu0 0.0
    %316 = vmatpush1.xpose.msra.mxu0 0.0
    %317 = vmatprep.subr.mxu0 0.0
    %318 = vmatpush1.xpose.msra.mxu0 0.0
    %319 = vmatprep.subr.mxu0 0.0
    %320 = vmatpush1.xpose.msra.mxu0 0.0
    %321 = vmatprep.subr.mxu0 0.0
    %322 = vmatpush1.xpose.msra.mxu0 0.0
    %323 = vmatprep.subr.mxu0 0.0
    %324 = vmatpush1.xpose.msra.mxu0 0.0
    %325 = vmatprep.subr.mxu0 0.0
    %326 = vmatpush1.xpose.msra.mxu0 0.0
    %327 = vmatprep.mubr.f32.mxu0 0.0
    %328 = vmatmul.mubr.f32.gmra.mrb[0].mxu0 %v255
    %v329 = vpop.f32.mrb[0].mxu0
    %v330 = vadd.f32 0.0, %v329
    %v331 = vpop.f32.mrb[0].mxu0
    %332 = vdwg.mxu0
    %v333 = vsel %vm253, %v330, -inf
    %334 = vmax.xlane.f32.xlu0 %v333
    %v335 = vpop.xlane.xlu0 %334
    %v336 = vsub.f32 %v330, %v335
    %v337 = vmul.f32 %v336, 1.442695
    %v338 = vpow.pop %v337
    %v339 = vsel %vm253, %v338, 0.0
    %340 = vadd.xlane.f32.xlu0 %v339
    %v341 = vpop.xlane.xlu0 %340
    %v342 = vrcp.pop %v341
    %v343 = vmul.f32 %v338, %v342
    %344 = vrot.lane.b32.xlu0 %v233, 96
    %v345 = vpop.permute.xlu0 %344
    %346 = vrot.lane.b32.xlu0 %v238, 96
    %v347 = vpop.permute.xlu0 %346
    %v351 = vsel %vm253, %v343, 0
    %353 = vmatprep.subr.mxu0 0.0
    %354 = vmatpush1.msra.mxu0 %v345
    %355 = vmatprep.subr.mxu0 0.0
    %356 = vmatpush1.msra.mxu0 %v347
    %357 = vmatprep.subr.mxu0 0.0
    %358 = vmatpush1.msra.mxu0 0.0
    %359 = vmatprep.subr.mxu0 0.0
    %360 = vmatpush1.msra.mxu0 0.0
    %361 = vmatprep.subr.mxu0 0.0
    %362 = vmatpush1.msra.mxu0 0.0
    %363 = vmatprep.subr.mxu0 0.0
    %364 = vmatpush1.msra.mxu0 0.0
    %365 = vmatprep.subr.mxu0 0.0
    %366 = vmatpush1.msra.mxu0 0.0
    %367 = vmatprep.subr.mxu0 0.0
    %368 = vmatpush1.msra.mxu0 0.0
    %369 = vmatprep.subr.mxu0 0.0
    %370 = vmatpush1.msra.mxu0 0.0
    %371 = vmatprep.subr.mxu0 0.0
    %372 = vmatpush1.msra.mxu0 0.0
    %373 = vmatprep.subr.mxu0 0.0
    %374 = vmatpush1.msra.mxu0 0.0
    %375 = vmatprep.subr.mxu0 0.0
    %376 = vmatpush1.msra.mxu0 0.0
    %377 = vmatprep.subr.mxu0 0.0
    %378 = vmatpush1.msra.mxu0 0.0
    %379 = vmatprep.subr.mxu0 0.0
    %380 = vmatpush1.msra.mxu0 0.0
    %381 = vmatprep.subr.mxu0 0.0
    %382 = vmatpush1.msra.mxu0 0.0
    %383 = vmatprep.subr.mxu0 0.0
    %384 = vmatpush1.msra.mxu0 0.0
    %385 = vmatprep.subr.mxu0 0.0
    %386 = vmatpush1.msra.mxu0 0.0
    %387 = vmatprep.subr.mxu0 0.0
    %388 = vmatpush1.msra.mxu0 0.0
    %389 = vmatprep.subr.mxu0 0.0
    %390 = vmatpush1.msra.mxu0 0.0
    %391 = vmatprep.subr.mxu0 0.0
    %392 = vmatpush1.msra.mxu0 0.0
    %393 = vmatprep.subr.mxu0 0.0
    %394 = vmatpush1.msra.mxu0 0.0
    %395 = vmatprep.subr.mxu0 0.0
    %396 = vmatpush1.msra.mxu0 0.0
    %397 = vmatprep.subr.mxu0 0.0
    %398 = vmatpush1.msra.mxu0 0.0
    %399 = vmatprep.subr.mxu0 0.0
    %400 = vmatpush1.msra.mxu0 0.0
    %401 = vmatprep.subr.mxu0 0.0
    %402 = vmatpush1.msra.mxu0 0.0
    %403 = vmatprep.subr.mxu0 0.0
    %404 = vmatpush1.msra.mxu0 0.0
    %405 = vmatprep.subr.mxu0 0.0
    %406 = vmatpush1.msra.mxu0 0.0
    %407 = vmatprep.subr.mxu0 0.0
    %408 = vmatpush1.msra.mxu0 0.0
    %409 = vmatprep.subr.mxu0 0.0
    %410 = vmatpush1.msra.mxu0 0.0
    %411 = vmatprep.subr.mxu0 0.0
    %412 = vmatpush1.msra.mxu0 0.0
    %413 = vmatprep.subr.mxu0 0.0
    %414 = vmatpush1.msra.mxu0 0.0
    %415 = vmatprep.subr.mxu0 0.0
    %416 = vmatpush1.msra.mxu0 0.0
    %417 = vmatprep.mubr.f32.mxu0 0.0
    %418 = vmatmul.mubr.f32.gmra.mrb[0].mxu0 %v351
    %v419 = vpop.f32.mrb[0].mxu0
    %v420 = vadd.f32 0.0, %v419
    %v421 = vpop.f32.mrb[0].mxu0
    %422 = vdwg.mxu0
    %423 = vrot.lane.b32.xlu0 %v251, 112
    %v424 = vpop.permute.xlu0 %423
    %425 = vrot.lane.b32.xlu0 %v233, 112
    %v426 = vpop.permute.xlu0 %425
    %427 = vrot.lane.b32.xlu0 %v238, 112
    %v428 = vpop.permute.xlu0 %427
    %v429 = vsel %vm253, %v424, 0
    %v431 = vsel %vm253, %v426, 0
    %v433 = vsel %vm253, %v428, 0
    %435 = vmatprep.subr.mxu0 0.0
    %436 = vmatpush1.xpose.msra.mxu0 %v431
    %437 = vmatprep.subr.mxu0 0.0
    %438 = vmatpush1.xpose.msra.mxu0 %v433
    %439 = vmatprep.subr.mxu0 0.0
    %440 = vmatpush1.xpose.msra.mxu0 0.0
    %441 = vmatprep.subr.mxu0 0.0
    %442 = vmatpush1.xpose.msra.mxu0 0.0
    %443 = vmatprep.subr.mxu0 0.0
    %444 = vmatpush1.xpose.msra.mxu0 0.0
    %445 = vmatprep.subr.mxu0 0.0
    %446 = vmatpush1.xpose.msra.mxu0 0.0
    %447 = vmatprep.subr.mxu0 0.0
    %448 = vmatpush1.xpose.msra.mxu0 0.0
    %449 = vmatprep.subr.mxu0 0.0
    %450 = vmatpush1.xpose.msra.mxu0 0.0
    %451 = vmatprep.subr.mxu0 0.0
    %452 = vmatpush1.xpose.msra.mxu0 0.0
    %453 = vmatprep.subr.mxu0 0.0
    %454 = vmatpush1.xpose.msra.mxu0 0.0
    %455 = vmatprep.subr.mxu0 0.0
    %456 = vmatpush1.xpose.msra.mxu0 0.0
    %457 = vmatprep.subr.mxu0 0.0
    %458 = vmatpush1.xpose.msra.mxu0 0.0
    %459 = vmatprep.subr.mxu0 0.0
    %460 = vmatpush1.xpose.msra.mxu0 0.0
    %461 = vmatprep.subr.mxu0 0.0
    %462 = vmatpush1.xpose.msra.mxu0 0.0
    %463 = vmatprep.subr.mxu0 0.0
    %464 = vmatpush1.xpose.msra.mxu0 0.0
    %465 = vmatprep.subr.mxu0 0.0
    %466 = vmatpush1.xpose.msra.mxu0 0.0
    %467 = vmatprep.subr.mxu0 0.0
    %468 = vmatpush1.xpose.msra.mxu0 0.0
    %469 = vmatprep.subr.mxu0 0.0
    %470 = vmatpush1.xpose.msra.mxu0 0.0
    %471 = vmatprep.subr.mxu0 0.0
    %472 = vmatpush1.xpose.msra.mxu0 0.0
    %473 = vmatprep.subr.mxu0 0.0
    %474 = vmatpush1.xpose.msra.mxu0 0.0
    %475 = vmatprep.subr.mxu0 0.0
    %476 = vmatpush1.xpose.msra.mxu0 0.0
    %477 = vmatprep.subr.mxu0 0.0
    %478 = vmatpush1.xpose.msra.mxu0 0.0
    %479 = vmatprep.subr.mxu0 0.0
    %480 = vmatpush1.xpose.msra.mxu0 0.0
    %481 = vmatprep.subr.mxu0 0.0
    %482 = vmatpush1.xpose.msra.mxu0 0.0
    %483 = vmatprep.subr.mxu0 0.0
    %484 = vmatpush1.xpose.msra.mxu0 0.0
    %485 = vmatprep.subr.mxu0 0.0
    %486 = vmatpush1.xpose.msra.mxu0 0.0
    %487 = vmatprep.subr.mxu0 0.0
    %488 = vmatpush1.xpose.msra.mxu0 0.0
    %489 = vmatprep.subr.mxu0 0.0
    %490 = vmatpush1.xpose.msra.mxu0 0.0
    %491 = vmatprep.subr.mxu0 0.0
    %492 = vmatpush1.xpose.msra.mxu0 0.0
    %493 = vmatprep.subr.mxu0 0.0
    %494 = vmatpush1.xpose.msra.mxu0 0.0
    %495 = vmatprep.subr.mxu0 0.0
    %496 = vmatpush1.xpose.msra.mxu0 0.0
    %497 = vmatprep.subr.mxu0 0.0
    %498 = vmatpush1.xpose.msra.mxu0 0.0
    %499 = vmatprep.mubr.f32.mxu0 0.0
    %500 = vmatmul.mubr.f32.gmra.mrb[0].mxu0 %v429
    %v501 = vpop.f32.mrb[0].mxu0
    %v502 = vadd.f32 0.0, %v501
    %v503 = vpop.f32.mrb[0].mxu0
    %504 = vdwg.mxu0
    %v505 = vsel %vm253, %v502, -inf
    %506 = vmax.xlane.f32.xlu0 %v505
    %v507 = vpop.xlane.xlu0 %506
    %v508 = vsub.f32 %v502, %v507
    %v509 = vmul.f32 %v508, 1.442695
    %v510 = vpow.pop %v509
    %v511 = vsel %vm253, %v510, 0.0
    %512 = vadd.xlane.f32.xlu0 %v511
    %v513 = vpop.xlane.xlu0 %512
    %v514 = vrcp.pop %v513
    %v515 = vmul.f32 %v510, %v514
    %516 = vrot.lane.b32.xlu0 %v233, 80
    %v517 = vpop.permute.xlu0 %516
    %518 = vrot.lane.b32.xlu0 %v238, 80
    %v519 = vpop.permute.xlu0 %518
    %v523 = vsel %vm253, %v515, 0
    %525 = vmatprep.subr.mxu0 0.0
    %526 = vmatpush1.msra.mxu0 %v517
    %527 = vmatprep.subr.mxu0 0.0
    %528 = vmatpush1.msra.mxu0 %v519
    %529 = vmatprep.subr.mxu0 0.0
    %530 = vmatpush1.msra.mxu0 0.0
    %531 = vmatprep.subr.mxu0 0.0
    %532 = vmatpush1.msra.mxu0 0.0
    %533 = vmatprep.subr.mxu0 0.0
    %534 = vmatpush1.msra.mxu0 0.0
    %535 = vmatprep.subr.mxu0 0.0
    %536 = vmatpush1.msra.mxu0 0.0
    %537 = vmatprep.subr.mxu0 0.0
    %538 = vmatpush1.msra.mxu0 0.0
    %539 = vmatprep.subr.mxu0 0.0
    %540 = vmatpush1.msra.mxu0 0.0
    %541 = vmatprep.subr.mxu0 0.0
    %542 = vmatpush1.msra.mxu0 0.0
    %543 = vmatprep.subr.mxu0 0.0
    %544 = vmatpush1.msra.mxu0 0.0
    %545 = vmatprep.subr.mxu0 0.0
    %546 = vmatpush1.msra.mxu0 0.0
    %547 = vmatprep.subr.mxu0 0.0
    %548 = vmatpush1.msra.mxu0 0.0
    %549 = vmatprep.subr.mxu0 0.0
    %550 = vmatpush1.msra.mxu0 0.0
    %551 = vmatprep.subr.mxu0 0.0
    %552 = vmatpush1.msra.mxu0 0.0
    %553 = vmatprep.subr.mxu0 0.0
    %554 = vmatpush1.msra.mxu0 0.0
    %555 = vmatprep.subr.mxu0 0.0
    %556 = vmatpush1.msra.mxu0 0.0
    %557 = vmatprep.subr.mxu0 0.0
    %558 = vmatpush1.msra.mxu0 0.0
    %559 = vmatprep.subr.mxu0 0.0
    %560 = vmatpush1.msra.mxu0 0.0
    %561 = vmatprep.subr.mxu0 0.0
    %562 = vmatpush1.msra.mxu0 0.0
    %563 = vmatprep.subr.mxu0 0.0
    %564 = vmatpush1.msra.mxu0 0.0
    %565 = vmatprep.subr.mxu0 0.0
    %566 = vmatpush1.msra.mxu0 0.0
    %567 = vmatprep.subr.mxu0 0.0
    %568 = vmatpush1.msra.mxu0 0.0
    %569 = vmatprep.subr.mxu0 0.0
    %570 = vmatpush1.msra.mxu0 0.0
    %571 = vmatprep.subr.mxu0 0.0
    %572 = vmatpush1.msra.mxu0 0.0
    %573 = vmatprep.subr.mxu0 0.0
    %574 = vmatpush1.msra.mxu0 0.0
    %575 = vmatprep.subr.mxu0 0.0
    %576 = vmatpush1.msra.mxu0 0.0
    %577 = vmatprep.subr.mxu0 0.0
    %578 = vmatpush1.msra.mxu0 0.0
    %579 = vmatprep.subr.mxu0 0.0
    %580 = vmatpush1.msra.mxu0 0.0
    %581 = vmatprep.subr.mxu0 0.0
    %582 = vmatpush1.msra.mxu0 0.0
    %583 = vmatprep.subr.mxu0 0.0
    %584 = vmatpush1.msra.mxu0 0.0
    %585 = vmatprep.subr.mxu0 0.0
    %586 = vmatpush1.msra.mxu0 0.0
    %587 = vmatprep.subr.mxu0 0.0
    %588 = vmatpush1.msra.mxu0 0.0
    %589 = vmatprep.mubr.f32.mxu0 0.0
    %590 = vmatmul.mubr.f32.gmra.mrb[0].mxu0 %v523
    %v591 = vpop.f32.mrb[0].mxu0
    %v592 = vadd.f32 0.0, %v591
    %v593 = vpop.f32.mrb[0].mxu0
    %594 = vdwg.mxu0
    %596 = vrot.lane.b32.xlu0 %v592, 16
    %v597 = vpop.permute.xlu0 %596
    %v599 = vsel %vm253, %v420, %v597
    %600 = vst.msk [vmem:[#allocation2] sm:$0xff] %vm28, %v599
    %v602 = vsel %vm253, %v252, 0
    %v605 = vsel %vm253, %v243, 0
    %v608 = vsel %vm253, %v248, 0
    %610 = vmatprep.subr.mxu0 0.0
    %611 = vmatpush1.xpose.msra.mxu0 %v605
    %612 = vmatprep.subr.mxu0 0.0
    %613 = vmatpush1.xpose.msra.mxu0 %v608
    %614 = vmatprep.subr.mxu0 0.0
    %615 = vmatpush1.xpose.msra.mxu0 0.0
    %616 = vmatprep.subr.mxu0 0.0
    %617 = vmatpush1.xpose.msra.mxu0 0.0
    %618 = vmatprep.subr.mxu0 0.0
    %619 = vmatpush1.xpose.msra.mxu0 0.0
    %620 = vmatprep.subr.mxu0 0.0
    %621 = vmatpush1.xpose.msra.mxu0 0.0
    %622 = vmatprep.subr.mxu0 0.0
    %623 = vmatpush1.xpose.msra.mxu0 0.0
    %624 = vmatprep.subr.mxu0 0.0
    %625 = vmatpush1.xpose.msra.mxu0 0.0
    %626 = vmatprep.subr.mxu0 0.0
    %627 = vmatpush1.xpose.msra.mxu0 0.0
    %628 = vmatprep.subr.mxu0 0.0
    %629 = vmatpush1.xpose.msra.mxu0 0.0
    %630 = vmatprep.subr.mxu0 0.0
    %631 = vmatpush1.xpose.msra.mxu0 0.0
    %632 = vmatprep.subr.mxu0 0.0
    %633 = vmatpush1.xpose.msra.mxu0 0.0
    %634 = vmatprep.subr.mxu0 0.0
    %635 = vmatpush1.xpose.msra.mxu0 0.0
    %636 = vmatprep.subr.mxu0 0.0
    %637 = vmatpush1.xpose.msra.mxu0 0.0
    %638 = vmatprep.subr.mxu0 0.0
    %639 = vmatpush1.xpose.msra.mxu0 0.0
    %640 = vmatprep.subr.mxu0 0.0
    %641 = vmatpush1.xpose.msra.mxu0 0.0
    %642 = vmatprep.subr.mxu0 0.0
    %643 = vmatpush1.xpose.msra.mxu0 0.0
    %644 = vmatprep.subr.mxu0 0.0
    %645 = vmatpush1.xpose.msra.mxu0 0.0
    %646 = vmatprep.subr.mxu0 0.0
    %647 = vmatpush1.xpose.msra.mxu0 0.0
    %648 = vmatprep.subr.mxu0 0.0
    %649 = vmatpush1.xpose.msra.mxu0 0.0
    %650 = vmatprep.subr.mxu0 0.0
    %651 = vmatpush1.xpose.msra.mxu0 0.0
    %652 = vmatprep.subr.mxu0 0.0
    %653 = vmatpush1.xpose.msra.mxu0 0.0
    %654 = vmatprep.subr.mxu0 0.0
    %655 = vmatpush1.xpose.msra.mxu0 0.0
    %656 = vmatprep.subr.mxu0 0.0
    %657 = vmatpush1.xpose.msra.mxu0 0.0
    %658 = vmatprep.subr.mxu0 0.0
    %659 = vmatpush1.xpose.msra.mxu0 0.0
    %660 = vmatprep.subr.mxu0 0.0
    %661 = vmatpush1.xpose.msra.mxu0 0.0
    %662 = vmatprep.subr.mxu0 0.0
    %663 = vmatpush1.xpose.msra.mxu0 0.0
    %664 = vmatprep.subr.mxu0 0.0
    %665 = vmatpush1.xpose.msra.mxu0 0.0
    %666 = vmatprep.subr.mxu0 0.0
    %667 = vmatpush1.xpose.msra.mxu0 0.0
    %668 = vmatprep.subr.mxu0 0.0
    %669 = vmatpush1.xpose.msra.mxu0 0.0
    %670 = vmatprep.subr.mxu0 0.0
    %671 = vmatpush1.xpose.msra.mxu0 0.0
    %672 = vmatprep.subr.mxu0 0.0
    %673 = vmatpush1.xpose.msra.mxu0 0.0
    %674 = vmatprep.mubr.f32.mxu0 0.0
    %675 = vmatmul.mubr.f32.gmra.mrb[0].mxu0 %v602
    %v676 = vpop.f32.mrb[0].mxu0
    %v677 = vadd.f32 0.0, %v676
    %v678 = vpop.f32.mrb[0].mxu0
    %679 = vdwg.mxu0
    %v680 = vsel %vm253, %v677, -inf
    %681 = vmax.xlane.f32.xlu0 %v680
    %v682 = vpop.xlane.xlu0 %681
    %v683 = vsub.f32 %v677, %v682
    %v684 = vmul.f32 %v683, 1.442695
    %v685 = vpow.pop %v684
    %v686 = vsel %vm253, %v685, 0.0
    %687 = vadd.xlane.f32.xlu0 %v686
    %v688 = vpop.xlane.xlu0 %687
    %v689 = vrcp.pop %v688
    %v690 = vmul.f32 %v685, %v689
    %691 = vrot.lane.b32.xlu0 %v243, 96
    %v692 = vpop.permute.xlu0 %691
    %693 = vrot.lane.b32.xlu0 %v248, 96
    %v694 = vpop.permute.xlu0 %693
    %v698 = vsel %vm253, %v690, 0
    %700 = vmatprep.subr.mxu0 0.0
    %701 = vmatpush1.msra.mxu0 %v692
    %702 = vmatprep.subr.mxu0 0.0
    %703 = vmatpush1.msra.mxu0 %v694
    %704 = vmatprep.subr.mxu0 0.0
    %705 = vmatpush1.msra.mxu0 0.0
    %706 = vmatprep.subr.mxu0 0.0
    %707 = vmatpush1.msra.mxu0 0.0
    %708 = vmatprep.subr.mxu0 0.0
    %709 = vmatpush1.msra.mxu0 0.0
    %710 = vmatprep.subr.mxu0 0.0
    %711 = vmatpush1.msra.mxu0 0.0
    %712 = vmatprep.subr.mxu0 0.0
    %713 = vmatpush1.msra.mxu0 0.0
    %714 = vmatprep.subr.mxu0 0.0
    %715 = vmatpush1.msra.mxu0 0.0
    %716 = vmatprep.subr.mxu0 0.0
    %717 = vmatpush1.msra.mxu0 0.0
    %718 = vmatprep.subr.mxu0 0.0
    %719 = vmatpush1.msra.mxu0 0.0
    %720 = vmatprep.subr.mxu0 0.0
    %721 = vmatpush1.msra.mxu0 0.0
    %722 = vmatprep.subr.mxu0 0.0
    %723 = vmatpush1.msra.mxu0 0.0
    %724 = vmatprep.subr.mxu0 0.0
    %725 = vmatpush1.msra.mxu0 0.0
    %726 = vmatprep.subr.mxu0 0.0
    %727 = vmatpush1.msra.mxu0 0.0
    %728 = vmatprep.subr.mxu0 0.0
    %729 = vmatpush1.msra.mxu0 0.0
    %730 = vmatprep.subr.mxu0 0.0
    %731 = vmatpush1.msra.mxu0 0.0
    %732 = vmatprep.subr.mxu0 0.0
    %733 = vmatpush1.msra.mxu0 0.0
    %734 = vmatprep.subr.mxu0 0.0
    %735 = vmatpush1.msra.mxu0 0.0
    %736 = vmatprep.subr.mxu0 0.0
    %737 = vmatpush1.msra.mxu0 0.0
    %738 = vmatprep.subr.mxu0 0.0
    %739 = vmatpush1.msra.mxu0 0.0
    %740 = vmatprep.subr.mxu0 0.0
    %741 = vmatpush1.msra.mxu0 0.0
    %742 = vmatprep.subr.mxu0 0.0
    %743 = vmatpush1.msra.mxu0 0.0
    %744 = vmatprep.subr.mxu0 0.0
    %745 = vmatpush1.msra.mxu0 0.0
    %746 = vmatprep.subr.mxu0 0.0
    %747 = vmatpush1.msra.mxu0 0.0
    %748 = vmatprep.subr.mxu0 0.0
    %749 = vmatpush1.msra.mxu0 0.0
    %750 = vmatprep.subr.mxu0 0.0
    %751 = vmatpush1.msra.mxu0 0.0
    %752 = vmatprep.subr.mxu0 0.0
    %753 = vmatpush1.msra.mxu0 0.0
    %754 = vmatprep.subr.mxu0 0.0
    %755 = vmatpush1.msra.mxu0 0.0
    %756 = vmatprep.subr.mxu0 0.0
    %757 = vmatpush1.msra.mxu0 0.0
    %758 = vmatprep.subr.mxu0 0.0
    %759 = vmatpush1.msra.mxu0 0.0
    %760 = vmatprep.subr.mxu0 0.0
    %761 = vmatpush1.msra.mxu0 0.0
    %762 = vmatprep.subr.mxu0 0.0
    %763 = vmatpush1.msra.mxu0 0.0
    %764 = vmatprep.mubr.f32.mxu0 0.0
    %765 = vmatmul.mubr.f32.gmra.mrb[0].mxu0 %v698
    %v766 = vpop.f32.mrb[0].mxu0
    %v767 = vadd.f32 0.0, %v766
    %v768 = vpop.f32.mrb[0].mxu0
    %769 = vdwg.mxu0
    %770 = vrot.lane.b32.xlu0 %v252, 112
    %v771 = vpop.permute.xlu0 %770
    %772 = vrot.lane.b32.xlu0 %v243, 112
    %v773 = vpop.permute.xlu0 %772
    %774 = vrot.lane.b32.xlu0 %v248, 112
    %v775 = vpop.permute.xlu0 %774
    %v776 = vsel %vm253, %v771, 0
    %v778 = vsel %vm253, %v773, 0
    %v780 = vsel %vm253, %v775, 0
    %782 = vmatprep.subr.mxu0 0.0
    %783 = vmatpush1.xpose.msra.mxu0 %v778
    %784 = vmatprep.subr.mxu0 0.0
    %785 = vmatpush1.xpose.msra.mxu0 %v780
    %786 = vmatprep.subr.mxu0 0.0
    %787 = vmatpush1.xpose.msra.mxu0 0.0
    %788 = vmatprep.subr.mxu0 0.0
    %789 = vmatpush1.xpose.msra.mxu0 0.0
    %790 = vmatprep.subr.mxu0 0.0
    %791 = vmatpush1.xpose.msra.mxu0 0.0
    %792 = vmatprep.subr.mxu0 0.0
    %793 = vmatpush1.xpose.msra.mxu0 0.0
    %794 = vmatprep.subr.mxu0 0.0
    %795 = vmatpush1.xpose.msra.mxu0 0.0
    %796 = vmatprep.subr.mxu0 0.0
    %797 = vmatpush1.xpose.msra.mxu0 0.0
    %798 = vmatprep.subr.mxu0 0.0
    %799 = vmatpush1.xpose.msra.mxu0 0.0
    %800 = vmatprep.subr.mxu0 0.0
    %801 = vmatpush1.xpose.msra.mxu0 0.0
    %802 = vmatprep.subr.mxu0 0.0
    %803 = vmatpush1.xpose.msra.mxu0 0.0
    %804 = vmatprep.subr.mxu0 0.0
    %805 = vmatpush1.xpose.msra.mxu0 0.0
    %806 = vmatprep.subr.mxu0 0.0
    %807 = vmatpush1.xpose.msra.mxu0 0.0
    %808 = vmatprep.subr.mxu0 0.0
    %809 = vmatpush1.xpose.msra.mxu0 0.0
    %810 = vmatprep.subr.mxu0 0.0
    %811 = vmatpush1.xpose.msra.mxu0 0.0
    %812 = vmatprep.subr.mxu0 0.0
    %813 = vmatpush1.xpose.msra.mxu0 0.0
    %814 = vmatprep.subr.mxu0 0.0
    %815 = vmatpush1.xpose.msra.mxu0 0.0
    %816 = vmatprep.subr.mxu0 0.0
    %817 = vmatpush1.xpose.msra.mxu0 0.0
    %818 = vmatprep.subr.mxu0 0.0
    %819 = vmatpush1.xpose.msra.mxu0 0.0
    %820 = vmatprep.subr.mxu0 0.0
    %821 = vmatpush1.xpose.msra.mxu0 0.0
    %822 = vmatprep.subr.mxu0 0.0
    %823 = vmatpush1.xpose.msra.mxu0 0.0
    %824 = vmatprep.subr.mxu0 0.0
    %825 = vmatpush1.xpose.msra.mxu0 0.0
    %826 = vmatprep.subr.mxu0 0.0
    %827 = vmatpush1.xpose.msra.mxu0 0.0
    %828 = vmatprep.subr.mxu0 0.0
    %829 = vmatpush1.xpose.msra.mxu0 0.0
    %830 = vmatprep.subr.mxu0 0.0
    %831 = vmatpush1.xpose.msra.mxu0 0.0
    %832 = vmatprep.subr.mxu0 0.0
    %833 = vmatpush1.xpose.msra.mxu0 0.0
    %834 = vmatprep.subr.mxu0 0.0
    %835 = vmatpush1.xpose.msra.mxu0 0.0
    %836 = vmatprep.subr.mxu0 0.0
    %837 = vmatpush1.xpose.msra.mxu0 0.0
    %838 = vmatprep.subr.mxu0 0.0
    %839 = vmatpush1.xpose.msra.mxu0 0.0
    %840 = vmatprep.subr.mxu0 0.0
    %841 = vmatpush1.xpose.msra.mxu0 0.0
    %842 = vmatprep.subr.mxu0 0.0
    %843 = vmatpush1.xpose.msra.mxu0 0.0
    %844 = vmatprep.subr.mxu0 0.0
    %845 = vmatpush1.xpose.msra.mxu0 0.0
    %846 = vmatprep.mubr.f32.mxu0 0.0
    %847 = vmatmul.mubr.f32.gmra.mrb[0].mxu0 %v776
    %v848 = vpop.f32.mrb[0].mxu0
    %v849 = vadd.f32 0.0, %v848
    %v850 = vpop.f32.mrb[0].mxu0
    %851 = vdwg.mxu0
    %v852 = vsel %vm253, %v849, -inf
    %853 = vmax.xlane.f32.xlu0 %v852
    %v854 = vpop.xlane.xlu0 %853
    %v855 = vsub.f32 %v849, %v854
    %v856 = vmul.f32 %v855, 1.442695
    %v857 = vpow.pop %v856
    %v858 = vsel %vm253, %v857, 0.0
    %859 = vadd.xlane.f32.xlu0 %v858
    %v860 = vpop.xlane.xlu0 %859
    %v861 = vrcp.pop %v860
    %v862 = vmul.f32 %v857, %v861
    %863 = vrot.lane.b32.xlu0 %v243, 80
    %v864 = vpop.permute.xlu0 %863
    %865 = vrot.lane.b32.xlu0 %v248, 80
    %v866 = vpop.permute.xlu0 %865
    %v870 = vsel %vm253, %v862, 0
    %872 = vmatprep.subr.mxu0 0.0
    %873 = vmatpush1.msra.mxu0 %v864
    %874 = vmatprep.subr.mxu0 0.0
    %875 = vmatpush1.msra.mxu0 %v866
    %876 = vmatprep.subr.mxu0 0.0
    %877 = vmatpush1.msra.mxu0 0.0
    %878 = vmatprep.subr.mxu0 0.0
    %879 = vmatpush1.msra.mxu0 0.0
    %880 = vmatprep.subr.mxu0 0.0
    %881 = vmatpush1.msra.mxu0 0.0
    %882 = vmatprep.subr.mxu0 0.0
    %883 = vmatpush1.msra.mxu0 0.0
    %884 = vmatprep.subr.mxu0 0.0
    %885 = vmatpush1.msra.mxu0 0.0
    %886 = vmatprep.subr.mxu0 0.0
    %887 = vmatpush1.msra.mxu0 0.0
    %888 = vmatprep.subr.mxu0 0.0
    %889 = vmatpush1.msra.mxu0 0.0
    %890 = vmatprep.subr.mxu0 0.0
    %891 = vmatpush1.msra.mxu0 0.0
    %892 = vmatprep.subr.mxu0 0.0
    %893 = vmatpush1.msra.mxu0 0.0
    %894 = vmatprep.subr.mxu0 0.0
    %895 = vmatpush1.msra.mxu0 0.0
    %896 = vmatprep.subr.mxu0 0.0
    %897 = vmatpush1.msra.mxu0 0.0
    %898 = vmatprep.subr.mxu0 0.0
    %899 = vmatpush1.msra.mxu0 0.0
    %900 = vmatprep.subr.mxu0 0.0
    %901 = vmatpush1.msra.mxu0 0.0
    %902 = vmatprep.subr.mxu0 0.0
    %903 = vmatpush1.msra.mxu0 0.0
    %904 = vmatprep.subr.mxu0 0.0
    %905 = vmatpush1.msra.mxu0 0.0
    %906 = vmatprep.subr.mxu0 0.0
    %907 = vmatpush1.msra.mxu0 0.0
    %908 = vmatprep.subr.mxu0 0.0
    %909 = vmatpush1.msra.mxu0 0.0
    %910 = vmatprep.subr.mxu0 0.0
    %911 = vmatpush1.msra.mxu0 0.0
    %912 = vmatprep.subr.mxu0 0.0
    %913 = vmatpush1.msra.mxu0 0.0
    %914 = vmatprep.subr.mxu0 0.0
    %915 = vmatpush1.msra.mxu0 0.0
    %916 = vmatprep.subr.mxu0 0.0
    %917 = vmatpush1.msra.mxu0 0.0
    %918 = vmatprep.subr.mxu0 0.0
    %919 = vmatpush1.msra.mxu0 0.0
    %920 = vmatprep.subr.mxu0 0.0
    %921 = vmatpush1.msra.mxu0 0.0
    %922 = vmatprep.subr.mxu0 0.0
    %923 = vmatpush1.msra.mxu0 0.0
    %924 = vmatprep.subr.mxu0 0.0
    %925 = vmatpush1.msra.mxu0 0.0
    %926 = vmatprep.subr.mxu0 0.0
    %927 = vmatpush1.msra.mxu0 0.0
    %928 = vmatprep.subr.mxu0 0.0
    %929 = vmatpush1.msra.mxu0 0.0
    %930 = vmatprep.subr.mxu0 0.0
    %931 = vmatpush1.msra.mxu0 0.0
    %932 = vmatprep.subr.mxu0 0.0
    %933 = vmatpush1.msra.mxu0 0.0
    %934 = vmatprep.subr.mxu0 0.0
    %935 = vmatpush1.msra.mxu0 0.0
    %936 = vmatprep.mubr.f32.mxu0 0.0
    %937 = vmatmul.mubr.f32.gmra.mrb[0].mxu0 %v870
    %v938 = vpop.f32.mrb[0].mxu0
    %v939 = vadd.f32 0.0, %v938
    %v940 = vpop.f32.mrb[0].mxu0
    %941 = vdwg.mxu0
    %943 = vrot.lane.b32.xlu0 %v939, 16
    %v944 = vpop.permute.xlu0 %943
    %v946 = vsel %vm253, %v767, %v944
    %s947 = scalar_lea.vmem [#allocation2], 8
    %948 = vst.msk [vmem:[%s947] sm:$0xff] %vm28, %v946
    // Predicated region
    $region18: #{tpu_custom_call.1} parent=1 // pred_check
      _
    $region19: #{tpu_custom_call.1} parent=1 // pred_check_branch
      %950 = sbr.rel (0) target = $region21
    $region20: #{tpu_custom_call.1} parent=1 // pred_region
      %s952 = ssub.s32 256, 256
      %953 = vsyncadd [#allocation3], %s952
      %s954 = sshll.u32 [#allocation2], 4
      %s955 = int_to_ptr.vmem [resolvable:$true] %s954
      %960 = dma.vmem_to_hbm [thread:$0]  %s955, 256, %s4, [#allocation3], 128, 128, 8
    $region21: #{tpu_custom_call.1} parent=1 // pred_fallthru
      _
    // Predicated region
    $region22: #{tpu_custom_call.1} parent=1 // pred_check
      _
    $region23: #{tpu_custom_call.1} parent=1 // pred_check_branch
      %962 = sbr.rel (0) target = $region25
    $region24: #{tpu_custom_call.1} parent=1 // pred_region
      %963 = dma.done [#allocation3], 256
    $region25: #{tpu_custom_call.1} parent=1 // pred_fallthru
      _
    %964 = vsyncpa [#allocation3], 1

// kernel: tpu_custom_call.1
$region0: #{tpu_custom_call.1}
  #allocation0 [shape = 'u32[]', space=smem, size = 0x4, offset = 0x4, fixed_abs, tag = 'smem constant byte address 0x4 - core index']
  #allocation1 [shape = 'u32[144,128]{1,0:T(1,128)}', space=vmem, size = 0x12000, scoped, tag = 'internal scratch']
  %s0 = inlined_call_operand.vmem [shape: f32[2,8,32], index: 0, kind: input, shape index: {}]
  %s1 = inlined_call_operand.vmem [shape: f32[2,16,32], index: 1, kind: input, shape index: {}]
  %s2 = inlined_call_operand.vmem [shape: f32[32,32], index: 2, kind: input, shape index: {}]
  %s3 = inlined_call_operand.vmem [shape: f32[64,32], index: 3, kind: input, shape index: {}]
  %s4 = inlined_call_operand.hbm [shape: f32[2,8,32], index: 4, kind: output, shape index: {}]
  %s5 = sld [smem:[#allocation0]]
  $region26: #{tpu_custom_call.1} parent=0
    _
  %s7 = ssub.s32 1, %s5
  %s8 = scalar_select 0, %s7, %s5
  $region1: #{tpu_custom_call.1} parent=0
    #allocation2 [shape = 'u8[8192]{0}', space=vmem, size = 0x2000, scoped, tag = 'output window, operand 0, single buffered']
    #allocation3 [shape = 's32[1]{0}', space=sflag, size = 0x4, scoped, tag = 'scoped memory for tpu_custom_call.1']
    %9 = vsyncpa [#allocation3], 0
    // Predicated region
    $region2: #{tpu_custom_call.1} parent=1 // pred_check
      _
    $region3: #{tpu_custom_call.1} parent=1 // pred_check_branch
      %11 = sbr.rel (0) target = $region5
    $region4: #{tpu_custom_call.1} parent=1 // pred_region
      _
    $region5: #{tpu_custom_call.1} parent=1 // pred_fallthru
      _
    // Predicated region
    $region6: #{tpu_custom_call.1} parent=1 // pred_check
      _
    $region7: #{tpu_custom_call.1} parent=1 // pred_check_branch
      %13 = sbr.rel (0) target = $region9
    $region8: #{tpu_custom_call.1} parent=1 // pred_region
      _
    $region9: #{tpu_custom_call.1} parent=1 // pred_fallthru
      _
    // Predicated region
    $region10: #{tpu_custom_call.1} parent=1 // pred_check
      _
    $region11: #{tpu_custom_call.1} parent=1 // pred_check_branch
      %15 = sbr.rel (0) target = $region13
    $region12: #{tpu_custom_call.1} parent=1 // pred_region
      _
    $region13: #{tpu_custom_call.1} parent=1 // pred_fallthru
      _
    // Predicated region
    $region14: #{tpu_custom_call.1} parent=1 // pred_check
      _
    $region15: #{tpu_custom_call.1} parent=1 // pred_check_branch
      %17 = sbr.rel (0) target = $region17
    $region16: #{tpu_custom_call.1} parent=1 // pred_region
      _
    $region17: #{tpu_custom_call.1} parent=1 // pred_fallthru
      _
    %v18 = vld [vmem:[%s0] sm:$0xff]
    %v19 = vld [vmem:[%s0 + $0x8] sm:$0xff]
    %v20 = vld [vmem:[%s1] sm:$0xff]
    %v21 = vld [vmem:[%s1 + $0x8] sm:$0xff]
    %v22 = vld [vmem:[%s1 + $0x10] sm:$0xff]
    %v23 = vld [vmem:[%s1 + $0x18] sm:$0xff]
    %v24 = vld [vmem:[%s2] sm:$0xff]
    %v25 = vld [vmem:[%s2 + $0x8] sm:$0xff]
    %v26 = vld [vmem:[%s2 + $0x10] sm:$0xff]
    %v27 = vld [vmem:[%s2 + $0x18] sm:$0xff]
    %vm28 = vcmask 261120
    %v30 = vsel %vm28, %v18, 0
    %v33 = vsel %vm28, %v19, 0
    %v36 = vsel %vm28, %v24, 0
    %v39 = vsel %vm28, %v25, 0
    %v42 = vsel %vm28, %v26, 0
    %v45 = vsel %vm28, %v27, 0
    %47 = vmatprep.subr.mxu0 0.0
    %48 = vmatpush1.xpose.msra.mxu0 %v36
    %49 = vmatprep.subr.mxu0 0.0
    %50 = vmatpush1.xpose.msra.mxu0 %v39
    %51 = vmatprep.subr.mxu0 0.0
    %52 = vmatpush1.xpose.msra.mxu0 %v42
    %53 = vmatprep.subr.mxu0 0.0
    %54 = vmatpush1.xpose.msra.mxu0 %v45
    %55 = vmatprep.subr.mxu0 0.0
    %56 = vmatpush1.xpose.msra.mxu0 0.0
    %57 = vmatprep.subr.mxu0 0.0
    %58 = vmatpush1.xpose.msra.mxu0 0.0
    %59 = vmatprep.subr.mxu0 0.0
    %60 = vmatpush1.xpose.msra.mxu0 0.0
    %61 = vmatprep.subr.mxu0 0.0
    %62 = vmatpush1.xpose.msra.mxu0 0.0
    %63 = vmatprep.subr.mxu0 0.0
    %64 = vmatpush1.xpose.msra.mxu0 0.0
    %65 = vmatprep.subr.mxu0 0.0
    %66 = vmatpush1.xpose.msra.mxu0 0.0
    %67 = vmatprep.subr.mxu0 0.0
    %68 = vmatpush1.xpose.msra.mxu0 0.0
    %69 = vmatprep.subr.mxu0 0.0
    %70 = vmatpush1.xpose.msra.mxu0 0.0
    %71 = vmatprep.subr.mxu0 0.0
    %72 = vmatpush1.xpose.msra.mxu0 0.0
    %73 = vmatprep.subr.mxu0 0.0
    %74 = vmatpush1.xpose.msra.mxu0 0.0
    %75 = vmatprep.subr.mxu0 0.0
    %76 = vmatpush1.xpose.msra.mxu0 0.0
    %77 = vmatprep.subr.mxu0 0.0
    %78 = vmatpush1.xpose.msra.mxu0 0.0
    %79 = vmatprep.subr.mxu0 0.0
    %80 = vmatpush1.xpose.msra.mxu0 0.0
    %81 = vmatprep.subr.mxu0 0.0
    %82 = vmatpush1.xpose.msra.mxu0 0.0
    %83 = vmatprep.subr.mxu0 0.0
    %84 = vmatpush1.xpose.msra.mxu0 0.0
    %85 = vmatprep.subr.mxu0 0.0
    %86 = vmatpush1.xpose.msra.mxu0 0.0
    %87 = vmatprep.subr.mxu0 0.0
    %88 = vmatpush1.xpose.msra.mxu0 0.0
    %89 = vmatprep.subr.mxu0 0.0
    %90 = vmatpush1.xpose.msra.mxu0 0.0
    %91 = vmatprep.subr.mxu0 0.0
    %92 = vmatpush1.xpose.msra.mxu0 0.0
    %93 = vmatprep.subr.mxu0 0.0
    %94 = vmatpush1.xpose.msra.mxu0 0.0
    %95 = vmatprep.subr.mxu0 0.0
    %96 = vmatpush1.xpose.msra.mxu0 0.0
    %97 = vmatprep.subr.mxu0 0.0
    %98 = vmatpush1.xpose.msra.mxu0 0.0
    %99 = vmatprep.subr.mxu0 0.0
    %100 = vmatpush1.xpose.msra.mxu0 0.0
    %101 = vmatprep.subr.mxu0 0.0
    %102 = vmatpush1.xpose.msra.mxu0 0.0
    %103 = vmatprep.subr.mxu0 0.0
    %104 = vmatpush1.xpose.msra.mxu0 0.0
    %105 = vmatprep.subr.mxu0 0.0
    %106 = vmatpush1.xpose.msra.mxu0 0.0
    %107 = vmatprep.subr.mxu0 0.0
    %108 = vmatpush1.xpose.msra.mxu0 0.0
    %109 = vmatprep.subr.mxu0 0.0
    %110 = vmatpush1.xpose.msra.mxu0 0.0
    %111 = vmatprep.mubr.f32.mxu0 0.0
    %112 = vmatmul.mubr.f32.gmra.mrb[0].mxu0 %v30
    %v113 = vpop.f32.mrb[0].mxu0
    %v114 = vadd.f32 0.0, %v113
    %v115 = vpop.f32.mrb[0].mxu0
    %116 = vmatprep.mubr.f32.mxu0 0.0
    %117 = vmatmul.mubr.f32.gmra.mrb[0].mxu0 %v33
    %v118 = vpop.f32.mrb[0].mxu0
    %v119 = vadd.f32 0.0, %v118
    %v120 = vpop.f32.mrb[0].mxu0
    %121 = vdwg.mxu0
    %v122 = vld [vmem:[%s3] sm:$0xff]
    %v123 = vld [vmem:[%s3 + $0x8] sm:$0xff]
    %v124 = vld [vmem:[%s3 + $0x10] sm:$0xff]
    %v125 = vld [vmem:[%s3 + $0x18] sm:$0xff]
    %v126 = vld [vmem:[%s3 + $0x20] sm:$0xff]
    %v127 = vld [vmem:[%s3 + $0x28] sm:$0xff]
    %v128 = vld [vmem:[%s3 + $0x30] sm:$0xff]
    %v129 = vld [vmem:[%s3 + $0x38] sm:$0xff]
    %v131 = vsel %vm28, %v20, 0
    %v134 = vsel %vm28, %v21, 0
    %v137 = vsel %vm28, %v22, 0
    %v140 = vsel %vm28, %v23, 0
    %v143 = vsel %vm28, %v122, 0
    %v146 = vsel %vm28, %v123, 0
    %v149 = vsel %vm28, %v124, 0
    %v152 = vsel %vm28, %v125, 0
    %v155 = vsel %vm28, %v126, 0
    %v158 = vsel %vm28, %v127, 0
    %v161 = vsel %vm28, %v128, 0
    %v164 = vsel %vm28, %v129, 0
    %166 = vmatprep.subr.mxu0 0.0
    %167 = vmatpush1.xpose.msra.mxu0 %v143
    %168 = vmatprep.subr.mxu0 0.0
    %169 = vmatpush1.xpose.msra.mxu0 %v146
    %170 = vmatprep.subr.mxu0 0.0
    %171 = vmatpush1.xpose.msra.mxu0 %v149
    %172 = vmatprep.subr.mxu0 0.0
    %173 = vmatpush1.xpose.msra.mxu0 %v152
    %174 = vmatprep.subr.mxu0 0.0
    %175 = vmatpush1.xpose.msra.mxu0 %v155
    %176 = vmatprep.subr.mxu0 0.0
    %177 = vmatpush1.xpose.msra.mxu0 %v158
    %178 = vmatprep.subr.mxu0 0.0
    %179 = vmatpush1.xpose.msra.mxu0 %v161
    %180 = vmatprep.subr.mxu0 0.0
    %181 = vmatpush1.xpose.msra.mxu0 %v164
    %182 = vmatprep.subr.mxu0 0.0
    %183 = vmatpush1.xpose.msra.mxu0 0.0
    %184 = vmatprep.subr.mxu0 0.0
    %185 = vmatpush1.xpose.msra.mxu0 0.0
    %186 = vmatprep.subr.mxu0 0.0
    %187 = vmatpush1.xpose.msra.mxu0 0.0
    %188 = vmatprep.subr.mxu0 0.0
    %189 = vmatpush1.xpose.msra.mxu0 0.0
    %190 = vmatprep.subr.mxu0 0.0
    %191 = vmatpush1.xpose.msra.mxu0 0.0
    %192 = vmatprep.subr.mxu0 0.0
    %193 = vmatpush1.xpose.msra.mxu0 0.0
    %194 = vmatprep.subr.mxu0 0.0
    %195 = vmatpush1.xpose.msra.mxu0 0.0
    %196 = vmatprep.subr.mxu0 0.0
    %197 = vmatpush1.xpose.msra.mxu0 0.0
    %198 = vmatprep.subr.mxu0 0.0
    %199 = vmatpush1.xpose.msra.mxu0 0.0
    %200 = vmatprep.subr.mxu0 0.0
    %201 = vmatpush1.xpose.msra.mxu0 0.0
    %202 = vmatprep.subr.mxu0 0.0
    %203 = vmatpush1.xpose.msra.mxu0 0.0
    %204 = vmatprep.subr.mxu0 0.0
    %205 = vmatpush1.xpose.msra.mxu0 0.0
    %206 = vmatprep.subr.mxu0 0.0
    %207 = vmatpush1.xpose.msra.mxu0 0.0
    %208 = vmatprep.subr.mxu0 0.0
    %209 = vmatpush1.xpose.msra.mxu0 0.0
    %210 = vmatprep.subr.mxu0 0.0
    %211 = vmatpush1.xpose.msra.mxu0 0.0
    %212 = vmatprep.subr.mxu0 0.0
    %213 = vmatpush1.xpose.msra.mxu0 0.0
    %214 = vmatprep.subr.mxu0 0.0
    %215 = vmatpush1.xpose.msra.mxu0 0.0
    %216 = vmatprep.subr.mxu0 0.0
    %217 = vmatpush1.xpose.msra.mxu0 0.0
    %218 = vmatprep.subr.mxu0 0.0
    %219 = vmatpush1.xpose.msra.mxu0 0.0
    %220 = vmatprep.subr.mxu0 0.0
    %221 = vmatpush1.xpose.msra.mxu0 0.0
    %222 = vmatprep.subr.mxu0 0.0
    %223 = vmatpush1.xpose.msra.mxu0 0.0
    %224 = vmatprep.subr.mxu0 0.0
    %225 = vmatpush1.xpose.msra.mxu0 0.0
    %226 = vmatprep.subr.mxu0 0.0
    %227 = vmatpush1.xpose.msra.mxu0 0.0
    %228 = vmatprep.subr.mxu0 0.0
    %229 = vmatpush1.xpose.msra.mxu0 0.0
    %230 = vmatprep.mubr.f32.mxu0 0.0
    %231 = vmatmul.mubr.f32.gmra.mrb[0].mxu0 %v131
    %v232 = vpop.f32.mrb[0].mxu0
    %v233 = vadd.f32 0.0, %v232
    %v234 = vpop.f32.mrb[0].mxu0
    %235 = vmatprep.mubr.f32.mxu0 0.0
    %236 = vmatmul.mubr.f32.gmra.mrb[0].mxu0 %v134
    %v237 = vpop.f32.mrb[0].mxu0
    %v238 = vadd.f32 0.0, %v237
    %v239 = vpop.f32.mrb[0].mxu0
    %240 = vmatprep.mubr.f32.mxu0 0.0
    %241 = vmatmul.mubr.f32.gmra.mrb[0].mxu0 %v137
    %v242 = vpop.f32.mrb[0].mxu0
    %v243 = vadd.f32 0.0, %v242
    %v244 = vpop.f32.mrb[0].mxu0
    %245 = vmatprep.mubr.f32.mxu0 0.0
    %246 = vmatmul.mubr.f32.gmra.mrb[0].mxu0 %v140
    %v247 = vpop.f32.mrb[0].mxu0
    %v248 = vadd.f32 0.0, %v247
    %v249 = vpop.f32.mrb[0].mxu0
    %250 = vdwg.mxu0
    %v251 = vmul.f32 %v114, 0.25
    %v252 = vmul.f32 %v119, 0.25
    %vm253 = vcmask 130048
    %v255 = vsel %vm253, %v251, 0
    %v258 = vsel %vm253, %v233, 0
    %v261 = vsel %vm253, %v238, 0
    %263 = vmatprep.subr.mxu0 0.0
    %264 = vmatpush1.xpose.msra.mxu0 %v258
    %265 = vmatprep.subr.mxu0 0.0
    %266 = vmatpush1.xpose.msra.mxu0 %v261
    %267 = vmatprep.subr.mxu0 0.0
    %268 = vmatpush1.xpose.msra.mxu0 0.0
    %269 = vmatprep.subr.mxu0 0.0
    %270 = vmatpush1.xpose.msra.mxu0 0.0
    %271 = vmatprep.subr.mxu0 0.0
    %272 = vmatpush1.xpose.msra.mxu0 0.0
    %273 = vmatprep.subr.mxu0 0.0
    %274 = vmatpush1.xpose.msra.mxu0 0.0
    %275 = vmatprep.subr.mxu0 0.0
    %276 = vmatpush1.xpose.msra.mxu0 0.0
    %277 = vmatprep.subr.mxu0 0.0
    %278 = vmatpush1.xpose.msra.mxu0 0.0
    %279 = vmatprep.subr.mxu0 0.0
    %280 = vmatpush1.xpose.msra.mxu0 0.0
    %281 = vmatprep.subr.mxu0 0.0
    %282 = vmatpush1.xpose.msra.mxu0 0.0
    %283 = vmatprep.subr.mxu0 0.0
    %284 = vmatpush1.xpose.msra.mxu0 0.0
    %285 = vmatprep.subr.mxu0 0.0
    %286 = vmatpush1.xpose.msra.mxu0 0.0
    %287 = vmatprep.subr.mxu0 0.0
    %288 = vmatpush1.xpose.msra.mxu0 0.0
    %289 = vmatprep.subr.mxu0 0.0
    %290 = vmatpush1.xpose.msra.mxu0 0.0
    %291 = vmatprep.subr.mxu0 0.0
    %292 = vmatpush1.xpose.msra.mxu0 0.0
    %293 = vmatprep.subr.mxu0 0.0
    %294 = vmatpush1.xpose.msra.mxu0 0.0
    %295 = vmatprep.subr.mxu0 0.0
    %296 = vmatpush1.xpose.msra.mxu0 0.0
    %297 = vmatprep.subr.mxu0 0.0
    %298 = vmatpush1.xpose.msra.mxu0 0.0
    %299 = vmatprep.subr.mxu0 0.0
    %300 = vmatpush1.xpose.msra.mxu0 0.0
    %301 = vmatprep.subr.mxu0 0.0
    %302 = vmatpush1.xpose.msra.mxu0 0.0
    %303 = vmatprep.subr.mxu0 0.0
    %304 = vmatpush1.xpose.msra.mxu0 0.0
    %305 = vmatprep.subr.mxu0 0.0
    %306 = vmatpush1.xpose.msra.mxu0 0.0
    %307 = vmatprep.subr.mxu0 0.0
    %308 = vmatpush1.xpose.msra.mxu0 0.0
    %309 = vmatprep.subr.mxu0 0.0
    %310 = vmatpush1.xpose.msra.mxu0 0.0
    %311 = vmatprep.subr.mxu0 0.0
    %312 = vmatpush1.xpose.msra.mxu0 0.0
    %313 = vmatprep.subr.mxu0 0.0
    %314 = vmatpush1.xpose.msra.mxu0 0.0
    %315 = vmatprep.subr.mxu0 0.0
    %316 = vmatpush1.xpose.msra.mxu0 0.0
    %317 = vmatprep.subr.mxu0 0.0
    %318 = vmatpush1.xpose.msra.mxu0 0.0
    %319 = vmatprep.subr.mxu0 0.0
    %320 = vmatpush1.xpose.msra.mxu0 0.0
    %321 = vmatprep.subr.mxu0 0.0
    %322 = vmatpush1.xpose.msra.mxu0 0.0
    %323 = vmatprep.subr.mxu0 0.0
    %324 = vmatpush1.xpose.msra.mxu0 0.0
    %325 = vmatprep.subr.mxu0 0.0
    %326 = vmatpush1.xpose.msra.mxu0 0.0
    %327 = vmatprep.mubr.f32.mxu0 0.0
    %328 = vmatmul.mubr.f32.gmra.mrb[0].mxu0 %v255
    %v329 = vpop.f32.mrb[0].mxu0
    %v330 = vadd.f32 0.0, %v329
    %v331 = vpop.f32.mrb[0].mxu0
    %332 = vdwg.mxu0
    %v333 = vsel %vm253, %v330, -inf
    %334 = vmax.xlane.f32.xlu0 %v333
    %v335 = vpop.xlane.xlu0 %334
    %v336 = vsub.f32 %v330, %v335
    %v337 = vmul.f32 %v336, 1.442695
    %v338 = vpow.pop %v337
    %v339 = vsel %vm253, %v338, 0.0
    %340 = vadd.xlane.f32.xlu0 %v339
    %v341 = vpop.xlane.xlu0 %340
    %v342 = vrcp.pop %v341
    %v343 = vmul.f32 %v338, %v342
    %344 = vrot.lane.b32.xlu0 %v233, 96
    %v345 = vpop.permute.xlu0 %344
    %346 = vrot.lane.b32.xlu0 %v238, 96
    %v347 = vpop.permute.xlu0 %346
    %v351 = vsel %vm253, %v343, 0
    %353 = vmatprep.subr.mxu0 0.0
    %354 = vmatpush1.msra.mxu0 %v345
    %355 = vmatprep.subr.mxu0 0.0
    %356 = vmatpush1.msra.mxu0 %v347
    %357 = vmatprep.subr.mxu0 0.0
    %358 = vmatpush1.msra.mxu0 0.0
    %359 = vmatprep.subr.mxu0 0.0
    %360 = vmatpush1.msra.mxu0 0.0
    %361 = vmatprep.subr.mxu0 0.0
    %362 = vmatpush1.msra.mxu0 0.0
    %363 = vmatprep.subr.mxu0 0.0
    %364 = vmatpush1.msra.mxu0 0.0
    %365 = vmatprep.subr.mxu0 0.0
    %366 = vmatpush1.msra.mxu0 0.0
    %367 = vmatprep.subr.mxu0 0.0
    %368 = vmatpush1.msra.mxu0 0.0
    %369 = vmatprep.subr.mxu0 0.0
    %370 = vmatpush1.msra.mxu0 0.0
    %371 = vmatprep.subr.mxu0 0.0
    %372 = vmatpush1.msra.mxu0 0.0
    %373 = vmatprep.subr.mxu0 0.0
    %374 = vmatpush1.msra.mxu0 0.0
    %375 = vmatprep.subr.mxu0 0.0
    %376 = vmatpush1.msra.mxu0 0.0
    %377 = vmatprep.subr.mxu0 0.0
    %378 = vmatpush1.msra.mxu0 0.0
    %379 = vmatprep.subr.mxu0 0.0
    %380 = vmatpush1.msra.mxu0 0.0
    %381 = vmatprep.subr.mxu0 0.0
    %382 = vmatpush1.msra.mxu0 0.0
    %383 = vmatprep.subr.mxu0 0.0
    %384 = vmatpush1.msra.mxu0 0.0
    %385 = vmatprep.subr.mxu0 0.0
    %386 = vmatpush1.msra.mxu0 0.0
    %387 = vmatprep.subr.mxu0 0.0
    %388 = vmatpush1.msra.mxu0 0.0
    %389 = vmatprep.subr.mxu0 0.0
    %390 = vmatpush1.msra.mxu0 0.0
    %391 = vmatprep.subr.mxu0 0.0
    %392 = vmatpush1.msra.mxu0 0.0
    %393 = vmatprep.subr.mxu0 0.0
    %394 = vmatpush1.msra.mxu0 0.0
    %395 = vmatprep.subr.mxu0 0.0
    %396 = vmatpush1.msra.mxu0 0.0
    %397 = vmatprep.subr.mxu0 0.0
    %398 = vmatpush1.msra.mxu0 0.0
    %399 = vmatprep.subr.mxu0 0.0
    %400 = vmatpush1.msra.mxu0 0.0
    %401 = vmatprep.subr.mxu0 0.0
    %402 = vmatpush1.msra.mxu0 0.0
    %403 = vmatprep.subr.mxu0 0.0
    %404 = vmatpush1.msra.mxu0 0.0
    %405 = vmatprep.subr.mxu0 0.0
    %406 = vmatpush1.msra.mxu0 0.0
    %407 = vmatprep.subr.mxu0 0.0
    %408 = vmatpush1.msra.mxu0 0.0
    %409 = vmatprep.subr.mxu0 0.0
    %410 = vmatpush1.msra.mxu0 0.0
    %411 = vmatprep.subr.mxu0 0.0
    %412 = vmatpush1.msra.mxu0 0.0
    %413 = vmatprep.subr.mxu0 0.0
    %414 = vmatpush1.msra.mxu0 0.0
    %415 = vmatprep.subr.mxu0 0.0
    %416 = vmatpush1.msra.mxu0 0.0
    %417 = vmatprep.mubr.f32.mxu0 0.0
    %418 = vmatmul.mubr.f32.gmra.mrb[0].mxu0 %v351
    %v419 = vpop.f32.mrb[0].mxu0
    %v420 = vadd.f32 0.0, %v419
    %v421 = vpop.f32.mrb[0].mxu0
    %422 = vdwg.mxu0
    %423 = vrot.lane.b32.xlu0 %v251, 112
    %v424 = vpop.permute.xlu0 %423
    %425 = vrot.lane.b32.xlu0 %v233, 112
    %v426 = vpop.permute.xlu0 %425
    %427 = vrot.lane.b32.xlu0 %v238, 112
    %v428 = vpop.permute.xlu0 %427
    %v429 = vsel %vm253, %v424, 0
    %v431 = vsel %vm253, %v426, 0
    %v433 = vsel %vm253, %v428, 0
    %435 = vmatprep.subr.mxu0 0.0
    %436 = vmatpush1.xpose.msra.mxu0 %v431
    %437 = vmatprep.subr.mxu0 0.0
    %438 = vmatpush1.xpose.msra.mxu0 %v433
    %439 = vmatprep.subr.mxu0 0.0
    %440 = vmatpush1.xpose.msra.mxu0 0.0
    %441 = vmatprep.subr.mxu0 0.0
    %442 = vmatpush1.xpose.msra.mxu0 0.0
    %443 = vmatprep.subr.mxu0 0.0
    %444 = vmatpush1.xpose.msra.mxu0 0.0
    %445 = vmatprep.subr.mxu0 0.0
    %446 = vmatpush1.xpose.msra.mxu0 0.0
    %447 = vmatprep.subr.mxu0 0.0
    %448 = vmatpush1.xpose.msra.mxu0 0.0
    %449 = vmatprep.subr.mxu0 0.0
    %450 = vmatpush1.xpose.msra.mxu0 0.0
    %451 = vmatprep.subr.mxu0 0.0
    %452 = vmatpush1.xpose.msra.mxu0 0.0
    %453 = vmatprep.subr.mxu0 0.0
    %454 = vmatpush1.xpose.msra.mxu0 0.0
    %455 = vmatprep.subr.mxu0 0.0
    %456 = vmatpush1.xpose.msra.mxu0 0.0
    %457 = vmatprep.subr.mxu0 0.0
    %458 = vmatpush1.xpose.msra.mxu0 0.0
    %459 = vmatprep.subr.mxu0 0.0
    %460 = vmatpush1.xpose.msra.mxu0 0.0
    %461 = vmatprep.subr.mxu0 0.0
    %462 = vmatpush1.xpose.msra.mxu0 0.0
    %463 = vmatprep.subr.mxu0 0.0
    %464 = vmatpush1.xpose.msra.mxu0 0.0
    %465 = vmatprep.subr.mxu0 0.0
    %466 = vmatpush1.xpose.msra.mxu0 0.0
    %467 = vmatprep.subr.mxu0 0.0
    %468 = vmatpush1.xpose.msra.mxu0 0.0
    %469 = vmatprep.subr.mxu0 0.0
    %470 = vmatpush1.xpose.msra.mxu0 0.0
    %471 = vmatprep.subr.mxu0 0.0
    %472 = vmatpush1.xpose.msra.mxu0 0.0
    %473 = vmatprep.subr.mxu0 0.0
    %474 = vmatpush1.xpose.msra.mxu0 0.0
    %475 = vmatprep.subr.mxu0 0.0
    %476 = vmatpush1.xpose.msra.mxu0 0.0
    %477 = vmatprep.subr.mxu0 0.0
    %478 = vmatpush1.xpose.msra.mxu0 0.0
    %479 = vmatprep.subr.mxu0 0.0
    %480 = vmatpush1.xpose.msra.mxu0 0.0
    %481 = vmatprep.subr.mxu0 0.0
    %482 = vmatpush1.xpose.msra.mxu0 0.0
    %483 = vmatprep.subr.mxu0 0.0
    %484 = vmatpush1.xpose.msra.mxu0 0.0
    %485 = vmatprep.subr.mxu0 0.0
    %486 = vmatpush1.xpose.msra.mxu0 0.0
    %487 = vmatprep.subr.mxu0 0.0
    %488 = vmatpush1.xpose.msra.mxu0 0.0
    %489 = vmatprep.subr.mxu0 0.0
    %490 = vmatpush1.xpose.msra.mxu0 0.0
    %491 = vmatprep.subr.mxu0 0.0
    %492 = vmatpush1.xpose.msra.mxu0 0.0
    %493 = vmatprep.subr.mxu0 0.0
    %494 = vmatpush1.xpose.msra.mxu0 0.0
    %495 = vmatprep.subr.mxu0 0.0
    %496 = vmatpush1.xpose.msra.mxu0 0.0
    %497 = vmatprep.subr.mxu0 0.0
    %498 = vmatpush1.xpose.msra.mxu0 0.0
    %499 = vmatprep.mubr.f32.mxu0 0.0
    %500 = vmatmul.mubr.f32.gmra.mrb[0].mxu0 %v429
    %v501 = vpop.f32.mrb[0].mxu0
    %v502 = vadd.f32 0.0, %v501
    %v503 = vpop.f32.mrb[0].mxu0
    %504 = vdwg.mxu0
    %v505 = vsel %vm253, %v502, -inf
    %506 = vmax.xlane.f32.xlu0 %v505
    %v507 = vpop.xlane.xlu0 %506
    %v508 = vsub.f32 %v502, %v507
    %v509 = vmul.f32 %v508, 1.442695
    %v510 = vpow.pop %v509
    %v511 = vsel %vm253, %v510, 0.0
    %512 = vadd.xlane.f32.xlu0 %v511
    %v513 = vpop.xlane.xlu0 %512
    %v514 = vrcp.pop %v513
    %v515 = vmul.f32 %v510, %v514
    %516 = vrot.lane.b32.xlu0 %v233, 80
    %v517 = vpop.permute.xlu0 %516
    %518 = vrot.lane.b32.xlu0 %v238, 80
    %v519 = vpop.permute.xlu0 %518
    %v523 = vsel %vm253, %v515, 0
    %525 = vmatprep.subr.mxu0 0.0
    %526 = vmatpush1.msra.mxu0 %v517
    %527 = vmatprep.subr.mxu0 0.0
    %528 = vmatpush1.msra.mxu0 %v519
    %529 = vmatprep.subr.mxu0 0.0
    %530 = vmatpush1.msra.mxu0 0.0
    %531 = vmatprep.subr.mxu0 0.0
    %532 = vmatpush1.msra.mxu0 0.0
    %533 = vmatprep.subr.mxu0 0.0
    %534 = vmatpush1.msra.mxu0 0.0
    %535 = vmatprep.subr.mxu0 0.0
    %536 = vmatpush1.msra.mxu0 0.0
    %537 = vmatprep.subr.mxu0 0.0
    %538 = vmatpush1.msra.mxu0 0.0
    %539 = vmatprep.subr.mxu0 0.0
    %540 = vmatpush1.msra.mxu0 0.0
    %541 = vmatprep.subr.mxu0 0.0
    %542 = vmatpush1.msra.mxu0 0.0
    %543 = vmatprep.subr.mxu0 0.0
    %544 = vmatpush1.msra.mxu0 0.0
    %545 = vmatprep.subr.mxu0 0.0
    %546 = vmatpush1.msra.mxu0 0.0
    %547 = vmatprep.subr.mxu0 0.0
    %548 = vmatpush1.msra.mxu0 0.0
    %549 = vmatprep.subr.mxu0 0.0
    %550 = vmatpush1.msra.mxu0 0.0
    %551 = vmatprep.subr.mxu0 0.0
    %552 = vmatpush1.msra.mxu0 0.0
    %553 = vmatprep.subr.mxu0 0.0
    %554 = vmatpush1.msra.mxu0 0.0
    %555 = vmatprep.subr.mxu0 0.0
    %556 = vmatpush1.msra.mxu0 0.0
    %557 = vmatprep.subr.mxu0 0.0
    %558 = vmatpush1.msra.mxu0 0.0
    %559 = vmatprep.subr.mxu0 0.0
    %560 = vmatpush1.msra.mxu0 0.0
    %561 = vmatprep.subr.mxu0 0.0
    %562 = vmatpush1.msra.mxu0 0.0
    %563 = vmatprep.subr.mxu0 0.0
    %564 = vmatpush1.msra.mxu0 0.0
    %565 = vmatprep.subr.mxu0 0.0
    %566 = vmatpush1.msra.mxu0 0.0
    %567 = vmatprep.subr.mxu0 0.0
    %568 = vmatpush1.msra.mxu0 0.0
    %569 = vmatprep.subr.mxu0 0.0
    %570 = vmatpush1.msra.mxu0 0.0
    %571 = vmatprep.subr.mxu0 0.0
    %572 = vmatpush1.msra.mxu0 0.0
    %573 = vmatprep.subr.mxu0 0.0
    %574 = vmatpush1.msra.mxu0 0.0
    %575 = vmatprep.subr.mxu0 0.0
    %576 = vmatpush1.msra.mxu0 0.0
    %577 = vmatprep.subr.mxu0 0.0
    %578 = vmatpush1.msra.mxu0 0.0
    %579 = vmatprep.subr.mxu0 0.0
    %580 = vmatpush1.msra.mxu0 0.0
    %581 = vmatprep.subr.mxu0 0.0
    %582 = vmatpush1.msra.mxu0 0.0
    %583 = vmatprep.subr.mxu0 0.0
    %584 = vmatpush1.msra.mxu0 0.0
    %585 = vmatprep.subr.mxu0 0.0
    %586 = vmatpush1.msra.mxu0 0.0
    %587 = vmatprep.subr.mxu0 0.0
    %588 = vmatpush1.msra.mxu0 0.0
    %589 = vmatprep.mubr.f32.mxu0 0.0
    %590 = vmatmul.mubr.f32.gmra.mrb[0].mxu0 %v523
    %v591 = vpop.f32.mrb[0].mxu0
    %v592 = vadd.f32 0.0, %v591
    %v593 = vpop.f32.mrb[0].mxu0
    %594 = vdwg.mxu0
    %596 = vrot.lane.b32.xlu0 %v592, 16
    %v597 = vpop.permute.xlu0 %596
    %v599 = vsel %vm253, %v420, %v597
    %600 = vst.msk [vmem:[#allocation2] sm:$0xff] %vm28, %v599
    %v602 = vsel %vm253, %v252, 0
    %v605 = vsel %vm253, %v243, 0
    %v608 = vsel %vm253, %v248, 0
    %610 = vmatprep.subr.mxu0 0.0
    %611 = vmatpush1.xpose.msra.mxu0 %v605
    %612 = vmatprep.subr.mxu0 0.0
    %613 = vmatpush1.xpose.msra.mxu0 %v608
    %614 = vmatprep.subr.mxu0 0.0
    %615 = vmatpush1.xpose.msra.mxu0 0.0
    %616 = vmatprep.subr.mxu0 0.0
    %617 = vmatpush1.xpose.msra.mxu0 0.0
    %618 = vmatprep.subr.mxu0 0.0
    %619 = vmatpush1.xpose.msra.mxu0 0.0
    %620 = vmatprep.subr.mxu0 0.0
    %621 = vmatpush1.xpose.msra.mxu0 0.0
    %622 = vmatprep.subr.mxu0 0.0
    %623 = vmatpush1.xpose.msra.mxu0 0.0
    %624 = vmatprep.subr.mxu0 0.0
    %625 = vmatpush1.xpose.msra.mxu0 0.0
    %626 = vmatprep.subr.mxu0 0.0
    %627 = vmatpush1.xpose.msra.mxu0 0.0
    %628 = vmatprep.subr.mxu0 0.0
    %629 = vmatpush1.xpose.msra.mxu0 0.0
    %630 = vmatprep.subr.mxu0 0.0
    %631 = vmatpush1.xpose.msra.mxu0 0.0
    %632 = vmatprep.subr.mxu0 0.0
    %633 = vmatpush1.xpose.msra.mxu0 0.0
    %634 = vmatprep.subr.mxu0 0.0
    %635 = vmatpush1.xpose.msra.mxu0 0.0
    %636 = vmatprep.subr.mxu0 0.0
    %637 = vmatpush1.xpose.msra.mxu0 0.0
    %638 = vmatprep.subr.mxu0 0.0
    %639 = vmatpush1.xpose.msra.mxu0 0.0
    %640 = vmatprep.subr.mxu0 0.0
    %641 = vmatpush1.xpose.msra.mxu0 0.0
    %642 = vmatprep.subr.mxu0 0.0
    %643 = vmatpush1.xpose.msra.mxu0 0.0
    %644 = vmatprep.subr.mxu0 0.0
    %645 = vmatpush1.xpose.msra.mxu0 0.0
    %646 = vmatprep.subr.mxu0 0.0
    %647 = vmatpush1.xpose.msra.mxu0 0.0
    %648 = vmatprep.subr.mxu0 0.0
    %649 = vmatpush1.xpose.msra.mxu0 0.0
    %650 = vmatprep.subr.mxu0 0.0
    %651 = vmatpush1.xpose.msra.mxu0 0.0
    %652 = vmatprep.subr.mxu0 0.0
    %653 = vmatpush1.xpose.msra.mxu0 0.0
    %654 = vmatprep.subr.mxu0 0.0
    %655 = vmatpush1.xpose.msra.mxu0 0.0
    %656 = vmatprep.subr.mxu0 0.0
    %657 = vmatpush1.xpose.msra.mxu0 0.0
    %658 = vmatprep.subr.mxu0 0.0
    %659 = vmatpush1.xpose.msra.mxu0 0.0
    %660 = vmatprep.subr.mxu0 0.0
    %661 = vmatpush1.xpose.msra.mxu0 0.0
    %662 = vmatprep.subr.mxu0 0.0
    %663 = vmatpush1.xpose.msra.mxu0 0.0
    %664 = vmatprep.subr.mxu0 0.0
    %665 = vmatpush1.xpose.msra.mxu0 0.0
    %666 = vmatprep.subr.mxu0 0.0
    %667 = vmatpush1.xpose.msra.mxu0 0.0
    %668 = vmatprep.subr.mxu0 0.0
    %669 = vmatpush1.xpose.msra.mxu0 0.0
    %670 = vmatprep.subr.mxu0 0.0
    %671 = vmatpush1.xpose.msra.mxu0 0.0
    %672 = vmatprep.subr.mxu0 0.0
    %673 = vmatpush1.xpose.msra.mxu0 0.0
    %674 = vmatprep.mubr.f32.mxu0 0.0
    %675 = vmatmul.mubr.f32.gmra.mrb[0].mxu0 %v602
    %v676 = vpop.f32.mrb[0].mxu0
    %v677 = vadd.f32 0.0, %v676
    %v678 = vpop.f32.mrb[0].mxu0
    %679 = vdwg.mxu0
    %v680 = vsel %vm253, %v677, -inf
    %681 = vmax.xlane.f32.xlu0 %v680
    %v682 = vpop.xlane.xlu0 %681
    %v683 = vsub.f32 %v677, %v682
    %v684 = vmul.f32 %v683, 1.442695
    %v685 = vpow.pop %v684
    %v686 = vsel %vm253, %v685, 0.0
    %687 = vadd.xlane.f32.xlu0 %v686
    %v688 = vpop.xlane.xlu0 %687
    %v689 = vrcp.pop %v688
    %v690 = vmul.f32 %v685, %v689
    %691 = vrot.lane.b32.xlu0 %v243, 96
    %v692 = vpop.permute.xlu0 %691
    %693 = vrot.lane.b32.xlu0 %v248, 96
    %v694 = vpop.permute.xlu0 %693
    %v698 = vsel %vm253, %v690, 0
    %700 = vmatprep.subr.mxu0 0.0
    %701 = vmatpush1.msra.mxu0 %v692
    %702 = vmatprep.subr.mxu0 0.0
    %703 = vmatpush1.msra.mxu0 %v694
    %704 = vmatprep.subr.mxu0 0.0
    %705 = vmatpush1.msra.mxu0 0.0
    %706 = vmatprep.subr.mxu0 0.0
    %707 = vmatpush1.msra.mxu0 0.0
    %708 = vmatprep.subr.mxu0 0.0
    %709 = vmatpush1.msra.mxu0 0.0
    %710 = vmatprep.subr.mxu0 0.0
    %711 = vmatpush1.msra.mxu0 0.0
    %712 = vmatprep.subr.mxu0 0.0
    %713 = vmatpush1.msra.mxu0 0.0
    %714 = vmatprep.subr.mxu0 0.0
    %715 = vmatpush1.msra.mxu0 0.0
    %716 = vmatprep.subr.mxu0 0.0
    %717 = vmatpush1.msra.mxu0 0.0
    %718 = vmatprep.subr.mxu0 0.0
    %719 = vmatpush1.msra.mxu0 0.0
    %720 = vmatprep.subr.mxu0 0.0
    %721 = vmatpush1.msra.mxu0 0.0
    %722 = vmatprep.subr.mxu0 0.0
    %723 = vmatpush1.msra.mxu0 0.0
    %724 = vmatprep.subr.mxu0 0.0
    %725 = vmatpush1.msra.mxu0 0.0
    %726 = vmatprep.subr.mxu0 0.0
    %727 = vmatpush1.msra.mxu0 0.0
    %728 = vmatprep.subr.mxu0 0.0
    %729 = vmatpush1.msra.mxu0 0.0
    %730 = vmatprep.subr.mxu0 0.0
    %731 = vmatpush1.msra.mxu0 0.0
    %732 = vmatprep.subr.mxu0 0.0
    %733 = vmatpush1.msra.mxu0 0.0
    %734 = vmatprep.subr.mxu0 0.0
    %735 = vmatpush1.msra.mxu0 0.0
    %736 = vmatprep.subr.mxu0 0.0
    %737 = vmatpush1.msra.mxu0 0.0
    %738 = vmatprep.subr.mxu0 0.0
    %739 = vmatpush1.msra.mxu0 0.0
    %740 = vmatprep.subr.mxu0 0.0
    %741 = vmatpush1.msra.mxu0 0.0
    %742 = vmatprep.subr.mxu0 0.0
    %743 = vmatpush1.msra.mxu0 0.0
    %744 = vmatprep.subr.mxu0 0.0
    %745 = vmatpush1.msra.mxu0 0.0
    %746 = vmatprep.subr.mxu0 0.0
    %747 = vmatpush1.msra.mxu0 0.0
    %748 = vmatprep.subr.mxu0 0.0
    %749 = vmatpush1.msra.mxu0 0.0
    %750 = vmatprep.subr.mxu0 0.0
    %751 = vmatpush1.msra.mxu0 0.0
    %752 = vmatprep.subr.mxu0 0.0
    %753 = vmatpush1.msra.mxu0 0.0
    %754 = vmatprep.subr.mxu0 0.0
    %755 = vmatpush1.msra.mxu0 0.0
    %756 = vmatprep.subr.mxu0 0.0
    %757 = vmatpush1.msra.mxu0 0.0
    %758 = vmatprep.subr.mxu0 0.0
    %759 = vmatpush1.msra.mxu0 0.0
    %760 = vmatprep.subr.mxu0 0.0
    %761 = vmatpush1.msra.mxu0 0.0
    %762 = vmatprep.subr.mxu0 0.0
    %763 = vmatpush1.msra.mxu0 0.0
    %764 = vmatprep.mubr.f32.mxu0 0.0
    %765 = vmatmul.mubr.f32.gmra.mrb[0].mxu0 %v698
    %v766 = vpop.f32.mrb[0].mxu0
    %v767 = vadd.f32 0.0, %v766
    %v768 = vpop.f32.mrb[0].mxu0
    %769 = vdwg.mxu0
    %770 = vrot.lane.b32.xlu0 %v252, 112
    %v771 = vpop.permute.xlu0 %770
    %772 = vrot.lane.b32.xlu0 %v243, 112
    %v773 = vpop.permute.xlu0 %772
    %774 = vrot.lane.b32.xlu0 %v248, 112
    %v775 = vpop.permute.xlu0 %774
    %v776 = vsel %vm253, %v771, 0
    %v778 = vsel %vm253, %v773, 0
    %v780 = vsel %vm253, %v775, 0
    %782 = vmatprep.subr.mxu0 0.0
    %783 = vmatpush1.xpose.msra.mxu0 %v778
    %784 = vmatprep.subr.mxu0 0.0
    %785 = vmatpush1.xpose.msra.mxu0 %v780
    %786 = vmatprep.subr.mxu0 0.0
    %787 = vmatpush1.xpose.msra.mxu0 0.0
    %788 = vmatprep.subr.mxu0 0.0
    %789 = vmatpush1.xpose.msra.mxu0 0.0
    %790 = vmatprep.subr.mxu0 0.0
    %791 = vmatpush1.xpose.msra.mxu0 0.0
    %792 = vmatprep.subr.mxu0 0.0
    %793 = vmatpush1.xpose.msra.mxu0 0.0
    %794 = vmatprep.subr.mxu0 0.0
    %795 = vmatpush1.xpose.msra.mxu0 0.0
    %796 = vmatprep.subr.mxu0 0.0
    %797 = vmatpush1.xpose.msra.mxu0 0.0
    %798 = vmatprep.subr.mxu0 0.0
    %799 = vmatpush1.xpose.msra.mxu0 0.0
    %800 = vmatprep.subr.mxu0 0.0
    %801 = vmatpush1.xpose.msra.mxu0 0.0
    %802 = vmatprep.subr.mxu0 0.0
    %803 = vmatpush1.xpose.msra.mxu0 0.0
    %804 = vmatprep.subr.mxu0 0.0
    %805 = vmatpush1.xpose.msra.mxu0 0.0
    %806 = vmatprep.subr.mxu0 0.0
    %807 = vmatpush1.xpose.msra.mxu0 0.0
    %808 = vmatprep.subr.mxu0 0.0
    %809 = vmatpush1.xpose.msra.mxu0 0.0
    %810 = vmatprep.subr.mxu0 0.0
    %811 = vmatpush1.xpose.msra.mxu0 0.0
    %812 = vmatprep.subr.mxu0 0.0
    %813 = vmatpush1.xpose.msra.mxu0 0.0
    %814 = vmatprep.subr.mxu0 0.0
    %815 = vmatpush1.xpose.msra.mxu0 0.0
    %816 = vmatprep.subr.mxu0 0.0
    %817 = vmatpush1.xpose.msra.mxu0 0.0
    %818 = vmatprep.subr.mxu0 0.0
    %819 = vmatpush1.xpose.msra.mxu0 0.0
    %820 = vmatprep.subr.mxu0 0.0
    %821 = vmatpush1.xpose.msra.mxu0 0.0
    %822 = vmatprep.subr.mxu0 0.0
    %823 = vmatpush1.xpose.msra.mxu0 0.0
    %824 = vmatprep.subr.mxu0 0.0
    %825 = vmatpush1.xpose.msra.mxu0 0.0
    %826 = vmatprep.subr.mxu0 0.0
    %827 = vmatpush1.xpose.msra.mxu0 0.0
    %828 = vmatprep.subr.mxu0 0.0
    %829 = vmatpush1.xpose.msra.mxu0 0.0
    %830 = vmatprep.subr.mxu0 0.0
    %831 = vmatpush1.xpose.msra.mxu0 0.0
    %832 = vmatprep.subr.mxu0 0.0
    %833 = vmatpush1.xpose.msra.mxu0 0.0
    %834 = vmatprep.subr.mxu0 0.0
    %835 = vmatpush1.xpose.msra.mxu0 0.0
    %836 = vmatprep.subr.mxu0 0.0
    %837 = vmatpush1.xpose.msra.mxu0 0.0
    %838 = vmatprep.subr.mxu0 0.0
    %839 = vmatpush1.xpose.msra.mxu0 0.0
    %840 = vmatprep.subr.mxu0 0.0
    %841 = vmatpush1.xpose.msra.mxu0 0.0
    %842 = vmatprep.subr.mxu0 0.0
    %843 = vmatpush1.xpose.msra.mxu0 0.0
    %844 = vmatprep.subr.mxu0 0.0
    %845 = vmatpush1.xpose.msra.mxu0 0.0
    %846 = vmatprep.mubr.f32.mxu0 0.0
    %847 = vmatmul.mubr.f32.gmra.mrb[0].mxu0 %v776
    %v848 = vpop.f32.mrb[0].mxu0
    %v849 = vadd.f32 0.0, %v848
    %v850 = vpop.f32.mrb[0].mxu0
    %851 = vdwg.mxu0
    %v852 = vsel %vm253, %v849, -inf
    %853 = vmax.xlane.f32.xlu0 %v852
    %v854 = vpop.xlane.xlu0 %853
    %v855 = vsub.f32 %v849, %v854
    %v856 = vmul.f32 %v855, 1.442695
    %v857 = vpow.pop %v856
    %v858 = vsel %vm253, %v857, 0.0
    %859 = vadd.xlane.f32.xlu0 %v858
    %v860 = vpop.xlane.xlu0 %859
    %v861 = vrcp.pop %v860
    %v862 = vmul.f32 %v857, %v861
    %863 = vrot.lane.b32.xlu0 %v243, 80
    %v864 = vpop.permute.xlu0 %863
    %865 = vrot.lane.b32.xlu0 %v248, 80
    %v866 = vpop.permute.xlu0 %865
    %v870 = vsel %vm253, %v862, 0
    %872 = vmatprep.subr.mxu0 0.0
    %873 = vmatpush1.msra.mxu0 %v864
    %874 = vmatprep.subr.mxu0 0.0
    %875 = vmatpush1.msra.mxu0 %v866
    %876 = vmatprep.subr.mxu0 0.0
    %877 = vmatpush1.msra.mxu0 0.0
    %878 = vmatprep.subr.mxu0 0.0
    %879 = vmatpush1.msra.mxu0 0.0
    %880 = vmatprep.subr.mxu0 0.0
    %881 = vmatpush1.msra.mxu0 0.0
    %882 = vmatprep.subr.mxu0 0.0
    %883 = vmatpush1.msra.mxu0 0.0
    %884 = vmatprep.subr.mxu0 0.0
    %885 = vmatpush1.msra.mxu0 0.0
    %886 = vmatprep.subr.mxu0 0.0
    %887 = vmatpush1.msra.mxu0 0.0
    %888 = vmatprep.subr.mxu0 0.0
    %889 = vmatpush1.msra.mxu0 0.0
    %890 = vmatprep.subr.mxu0 0.0
    %891 = vmatpush1.msra.mxu0 0.0
    %892 = vmatprep.subr.mxu0 0.0
    %893 = vmatpush1.msra.mxu0 0.0
    %894 = vmatprep.subr.mxu0 0.0
    %895 = vmatpush1.msra.mxu0 0.0
    %896 = vmatprep.subr.mxu0 0.0
    %897 = vmatpush1.msra.mxu0 0.0
    %898 = vmatprep.subr.mxu0 0.0
    %899 = vmatpush1.msra.mxu0 0.0
    %900 = vmatprep.subr.mxu0 0.0
    %901 = vmatpush1.msra.mxu0 0.0
    %902 = vmatprep.subr.mxu0 0.0
    %903 = vmatpush1.msra.mxu0 0.0
    %904 = vmatprep.subr.mxu0 0.0
    %905 = vmatpush1.msra.mxu0 0.0
    %906 = vmatprep.subr.mxu0 0.0
    %907 = vmatpush1.msra.mxu0 0.0
    %908 = vmatprep.subr.mxu0 0.0
    %909 = vmatpush1.msra.mxu0 0.0
    %910 = vmatprep.subr.mxu0 0.0
    %911 = vmatpush1.msra.mxu0 0.0
    %912 = vmatprep.subr.mxu0 0.0
    %913 = vmatpush1.msra.mxu0 0.0
    %914 = vmatprep.subr.mxu0 0.0
    %915 = vmatpush1.msra.mxu0 0.0
    %916 = vmatprep.subr.mxu0 0.0
    %917 = vmatpush1.msra.mxu0 0.0
    %918 = vmatprep.subr.mxu0 0.0
    %919 = vmatpush1.msra.mxu0 0.0
    %920 = vmatprep.subr.mxu0 0.0
    %921 = vmatpush1.msra.mxu0 0.0
    %922 = vmatprep.subr.mxu0 0.0
    %923 = vmatpush1.msra.mxu0 0.0
    %924 = vmatprep.subr.mxu0 0.0
    %925 = vmatpush1.msra.mxu0 0.0
    %926 = vmatprep.subr.mxu0 0.0
    %927 = vmatpush1.msra.mxu0 0.0
    %928 = vmatprep.subr.mxu0 0.0
    %929 = vmatpush1.msra.mxu0 0.0
    %930 = vmatprep.subr.mxu0 0.0
    %931 = vmatpush1.msra.mxu0 0.0
    %932 = vmatprep.subr.mxu0 0.0
    %933 = vmatpush1.msra.mxu0 0.0
    %934 = vmatprep.subr.mxu0 0.0
    %935 = vmatpush1.msra.mxu0 0.0
    %936 = vmatprep.mubr.f32.mxu0 0.0
    %937 = vmatmul.mubr.f32.gmra.mrb[0].mxu0 %v870
    %v938 = vpop.f32.mrb[0].mxu0
    %v939 = vadd.f32 0.0, %v938
    %v940 = vpop.f32.mrb[0].mxu0
    %941 = vdwg.mxu0
    %943 = vrot.lane.b32.xlu0 %v939, 16
    %v944 = vpop.permute.xlu0 %943
    %v946 = vsel %vm253, %v767, %v944
    %s947 = scalar_lea.vmem [#allocation2], 8
    %948 = vst.msk [vmem:[%s947] sm:$0xff] %vm28, %v946
    // Predicated region
    $region18: #{tpu_custom_call.1} parent=1 // pred_check
      _
    $region19: #{tpu_custom_call.1} parent=1 // pred_check_branch
      %950 = sbr.rel (0) target = $region21
    $region20: #{tpu_custom_call.1} parent=1 // pred_region
      %s952 = ssub.s32 256, 256
      %953 = vsyncadd [#allocation3], %s952
      %s954 = sshll.u32 [#allocation2], 4
      %s955 = int_to_ptr.vmem [resolvable:$true] %s954
      %960 = dma.vmem_to_hbm [thread:$0]  %s955, 256, %s4, [#allocation3], 128, 128, 8
    $region21: #{tpu_custom_call.1} parent=1 // pred_fallthru
      _
    // Predicated region
    $region22: #{tpu_custom_call.1} parent=1 // pred_check
      _
    $region23: #{tpu_custom_call.1} parent=1 // pred_check_branch
      %962 = sbr.rel (0) target = $region25
    $region24: #{tpu_custom_call.1} parent=1 // pred_region
      %963 = dma.done [#allocation3], 256
    $region25: #{tpu_custom_call.1} parent=1 // pred_fallthru
      _
    %964 = vsyncpa [#allocation3], 1

</llo_original>
